<compile_context>
chip_gen: v7x
topology: tpu7x:2x2x1
jax: 0.10.0
libtpu: 0.0.40
codegen_flags: <defaults>
</compile_context>

<pallas_src>
import math

import jax
import jax.numpy as jnp
from jax.experimental import pallas as pl
from jax.experimental.pallas import tpu as pltpu

H = 64          # hidden size, config.hidden_sizes = (64, 64, 64)
H2 = 2 * H      # two batch elements lane-packed -> 128 lanes


# ----------------------------------------------------------------------------
# Fused Pallas kernel (conv1 -> mask -> conv2 -> pos_embed + FFN head + tanh)
# ----------------------------------------------------------------------------
def _make_fused_kernel(bt2: int, n_pad: int, np_head: int):
    """bt2 = batch *pairs* per grid step, n_pad = padded entity count."""
    R = bt2 * n_pad   # packed rows per grid step

    def kernel(x_ref, aux_ref, wbig_ref, wsm_ref, o_ref):
        f32 = jnp.float32
        x = x_ref[...]        # (R, 128)  features, batches 2p | 2p+1 lane-packed
        aux = aux_ref[...]    # (R, 8)    [x_a, y_a, x_b, y_b, mask_a, mask_b, 0, 0]
        wsm = wsm_ref[...]    # (32, 128) rel/pos weights (rows 0:4/8:12/16:20) + biases (24:32)

        def row(k):           # (1, 128) bias / rel-weight row
            return wsm[k:k + 1, :]

        # lane-broadcast mask: lanes [0,64) <- mask_a, [64,128) <- mask_b
        lane = jax.lax.broadcasted_iota(jnp.int32, (R, H2), 1)
        in_left = lane < H
        mask_l = jnp.where(in_left,
                           jnp.broadcast_to(aux[:, 4:5], (R, H2)),
                           jnp.broadcast_to(aux[:, 5:6], (R, H2)))        # (R,128)
        # dead/padded sources pushed to -1e30 so relu() already zeroes their msgs
        neg_bias = (mask_l - 1.0) * 1e30

        # per-batch valid-source counts: ONE reduction, EUP reciprocal
        cnt = jnp.sum(mask_l.reshape(bt2, n_pad, H2), axis=1)             # (bt2,128)
        inv_cnt = pl.reciprocal(jnp.maximum(cnt, 1.0), approx=True)       # (bt2,128)

        def pos_proj(base):    # K=4 lane-packed position projection, stays on VPU
            return (aux[:, 0:1] * row(base + 0) + aux[:, 1:2] * row(base + 1)
                    + aux[:, 2:3] * row(base + 2) + aux[:, 3:4] * row(base + 3))

        def point_conv(h, wsrc_idx, wout_idx, rel_base, bcomb_row, bout_row):
            # source-only GEMM hoisted over all batch pairs (block-diag weight)
            s = jnp.dot(h.astype(jnp.bfloat16), wbig_ref[wsrc_idx],
                        preferred_element_type=f32) + row(bcomb_row)      # (R,128)
            p = pos_proj(rel_base)                                        # (R,128)
            sp = (s + p + neg_bias).reshape(bt2, n_pad, H2)
            pt = p.reshape(bt2, n_pad, H2)
            # pairwise block, vectorized over batch pairs at full 128-lane width;
            # msg[b,i,j,:] = relu(s_j + p_j - p_i); accumulate over sources j.
            acc = jnp.maximum(sp[:, 0:1, :] - pt, 0.0)
            for j in range(1, n_pad):                    # static, n_pad is small
                acc = acc + jnp.maximum(sp[:, j:j + 1, :] - pt, 0.0)
            agg = (acc * inv_cnt[:, None, :]).reshape(R, H2)   # masked mean
            out = jnp.dot(agg.astype(jnp.bfloat16), wbig_ref[wout_idx],
                          preferred_element_type=f32)
            return jnp.maximum(out + row(bout_row) + h, 0.0)   # residual + relu

        h1 = point_conv(x, 0, 1, 0, 24, 25)
        h1 = h1 * mask_l                                   # out_prey[~alive] = 0
        h2 = point_conv(h1, 2, 3, 8, 26, 27)

        # actor head only on the first np_head (>= Np) rows of each batch element
        hin = h2 + pos_proj(16) + row(28)
        hin = hin.reshape(bt2, n_pad, H2)[:, :np_head, :].reshape(bt2 * np_head, H2)
        g1 = jnp.maximum(jnp.dot(hin.astype(jnp.bfloat16), wbig_ref[4],
                                 preferred_element_type=f32) + row(29), 0.0)
        g2 = jnp.maximum(jnp.dot(g1.astype(jnp.bfloat16), wbig_ref[5],
                                 preferred_element_type=f32) + row(30), 0.0)
        # lane-dense (rows,128) store; wrapper slices cols [0:2] / [64:66]
        o_ref[...] = jnp.tanh(jnp.dot(g2.astype(jnp.bfloat16), wbig_ref[6],
                                      preferred_element_type=f32) + row(31))

    return kernel


# ----------------------------------------------------------------------------
# Parameters (deterministic, synthetic -- mimics reset_parameters shapes)
# ----------------------------------------------------------------------------
def _xavier(key, shape):
    fan_in, fan_out = shape[0], shape[-1]
    std = math.sqrt(2.0 / (fan_in + fan_out))
    return std * jax.random.normal(key, shape, dtype=jnp.float32)


def init_params(key):
    ks = jax.random.split(key, 16)
    zeros = lambda s: jnp.zeros(s, jnp.float32)

    def conv_params(k):
        k0, k1, k2 = jax.random.split(k, 3)
        return (_xavier(k0, (H, H)),   # W_src
                zeros((1, H)),         # b_src + b_rel pre-combined (both zero-init)
                _xavier(k1, (2, H)),   # W_rel
                _xavier(k2, (H, H)),   # W_out
                zeros((1, H)))         # b_out

    return {
        "embedding": _xavier(ks[0], (3, H)),               # nn.Embedding(3, H)
        "obst_w": _xavier(ks[1], (1, H)),                  # nn.Linear(1, H)
        "obst_b": zeros((1, H)),
        "conv1": conv_params(ks[2]),
        "conv2": conv_params(ks[3]),
        "head": (
            _xavier(ks[4], (2, H)), zeros((1, H)),         # pos_embedding Linear(2, H)
            _xavier(ks[5], (H, H)), zeros((1, H)),         # FFN Linear(H, H)
            _xavier(ks[6], (H, H)), zeros((1, H)),         # FFN Linear(H, H)
            jax.random.uniform(ks[7], (H, 2), jnp.float32, -0.01, 0.01),  # Linear(H, 2)
            zeros((1, 2)),
        ),
    }


# ----------------------------------------------------------------------------
# Forward pass: cheap XLA prep + one fused Pallas kernel + tiny XLA epilogue
# ----------------------------------------------------------------------------
def predator_actor_forward(params, pred_state, prey_state, obst_state, prey_is_alive):
    f32 = jnp.float32
    B, Np, _ = pred_state.shape
    Ny, No = prey_state.shape[1], obst_state.shape[1]
    N = Np + Ny + No
    n_pad = max(8, ((N + 7) // 8) * 8)                 # entities -> sublane multiple
    np_head = min(n_pad, ((Np + 7) // 8) * 8)          # head rows per batch element

    # batch pairs (lane packing) and grid sizing: ~256 packed rows per step,
    # >= 2 grid steps when B permits so both v7x TensorCores get work.
    pairs = -(-B // 2)
    bt2_cap = max(1, 256 // n_pad)
    bt2 = 1 if pairs <= 1 else max(1, min(bt2_cap, -(-pairs // 2)))
    g = -(-pairs // bt2)
    pairs_pad = g * bt2
    b_pad2 = pairs_pad * 2
    rows2 = bt2 * n_pad

    emb = params["embedding"]
    pos_obst = obst_state[..., :2].astype(f32)
    r_obst = obst_state[..., 2:3].astype(f32)
    alive = prey_is_alive.astype(f32)[..., None]       # (B, Ny, 1)

    # initial entity features (pure broadcast/elementwise -- XLA fuses for free)
    x_pred = jnp.broadcast_to(emb[0][None, None, :], (B, Np, H)).astype(f32)
    x_prey = jnp.broadcast_to(emb[1][None, None, :], (B, Ny, H)).astype(f32) * alive
    x_obst = emb[2][None, None, :] + r_obst * params["obst_w"] + params["obst_b"]

    pad_e = n_pad - N
    x0 = jnp.concatenate([x_pred, x_prey, x_obst, jnp.zeros((B, pad_e, H), f32)], axis=1)
    pos = jnp.concatenate([pred_state.astype(f32), prey_state.astype(f32), pos_obst,
                           jnp.zeros((B, pad_e, 2), f32)], axis=1)
    mask = jnp.concatenate([jnp.ones((B, Np, 1), f32), alive, jnp.ones((B, No, 1), f32),
                            jnp.zeros((B, pad_e, 1), f32)], axis=1)

    def bpad(a):
        return jnp.pad(a, ((0, b_pad2 - B), (0, 0), (0, 0)))

    x0, pos, mask = bpad(x0), bpad(pos), bpad(mask)

    # lane-pack batch pairs: batch 2p -> lanes [0,64), batch 2p+1 -> lanes [64,128)
    xr = x0.reshape(pairs_pad, 2, n_pad, H)
    x_packed = jnp.concatenate([xr[:, 0], xr[:, 1]], axis=-1).reshape(pairs_pad * n_pad, H2)
    pr = pos.reshape(pairs_pad, 2, n_pad, 2)
    mr = mask.reshape(pairs_pad, 2, n_pad, 1)
    aux = jnp.concatenate([pr[:, 0], pr[:, 1], mr[:, 0], mr[:, 1],
                           jnp.zeros((pairs_pad, n_pad, 2), f32)], axis=-1)
    aux = aux.reshape(pairs_pad * n_pad, 8)            # (rows, 8) pos+mask slab

    # --- pack weights: block-diagonal 128x128 GEMM stack (bf16) + small f32 stack
    def bdiag(w):
        z = jnp.zeros_like(w)
        return jnp.concatenate([jnp.concatenate([w, z], axis=1),
                                jnp.concatenate([z, w], axis=1)], axis=0)

    def dup(b):
        return jnp.concatenate([b, b], axis=-1)

    (w1s, b1c, w1r, w1o, b1o) = params["conv1"]
    (w2s, b2c, w2r, w2o, b2o) = params["conv2"]
    (wp, bp, wf1, bf1, wf2, bf2, wf3, bf3) = params["head"]

    wf3p = jnp.zeros((H2, H2), f32).at[:H, 0:2].set(wf3).at[H:, H:H + 2].set(wf3)
    bf3p = jnp.zeros((1, H2), f32).at[:, 0:2].set(bf3).at[:, H:H + 2].set(bf3)

    wbig = jnp.stack([bdiag(w1s), bdiag(w1o), bdiag(w2s), bdiag(w2o),
                      bdiag(wf1), bdiag(wf2), wf3p], axis=0).astype(jnp.bfloat16)

    zrow4 = jnp.zeros((4, H2), f32)
    wsmall = jnp.concatenate([
        bdiag(w1r), zrow4,            # rows  0:4  conv1 W_rel (packed), 4:8 pad
        bdiag(w2r), zrow4,            # rows  8:12 conv2 W_rel,          12:16 pad
        bdiag(wp), zrow4,             # rows 16:20 pos_embedding W,      20:24 pad
        dup(b1c), dup(b1o), dup(b2c), dup(b2o),
        dup(bp), dup(bf1), dup(bf2), bf3p,            # rows 24..31 biases
    ], axis=0)                                        # (32, 128)

    out = pl.pallas_call(
        _make_fused_kernel(bt2, n_pad, np_head),
        out_shape=jax.ShapeDtypeStruct((pairs_pad * np_head, H2), f32),
        grid=(g,),
        in_specs=[
            pl.BlockSpec((rows2, H2), lambda i: (i, 0)),        # features
            pl.BlockSpec((rows2, 8), lambda i: (i, 0)),         # pos + mask
            pl.BlockSpec((7, H2, H2), lambda i: (0, 0, 0)),     # GEMM weights (bf16)
            pl.BlockSpec((32, H2), lambda i: (0, 0)),           # rel/pos weights + biases
        ],
        out_specs=pl.BlockSpec((bt2 * np_head, H2), lambda i: (i, 0)),
        compiler_params=pltpu.CompilerParams(dimension_semantics=("parallel",)),
    )(x_packed, aux, wbig, wsmall)

    # unpack lanes -> batches, keep predator rows; atan2 epilogue stays in XLA glue
    y = out.reshape(pairs_pad, np_head, H2)
    y = jnp.stack([y[:, :, 0:2], y[:, :, H:H + 2]], axis=1)     # (pairs, 2, np_head, 2)
    y = y.reshape(b_pad2, np_head, 2)[:B, :Np, :]
    act = jnp.arctan2(y[..., 0], y[..., 1]) / math.pi
    return act[..., None]


if __name__ == "__main__":
    key = jax.random.PRNGKey(0)
    k1, k2, k3, k4, k5, k6 = jax.random.split(key, 6)

    B, Np, Ny, No = 2, 2, 5, 3
    pred_state = jax.random.uniform(k1, (B, Np, 2), jnp.float32, -1.0, 1.0)
    prey_state = jax.random.uniform(k2, (B, Ny, 2), jnp.float32, -1.0, 1.0)
    obst_pos = jax.random.uniform(k3, (B, No, 2), jnp.float32, -1.0, 1.0)
    obst_r = jax.random.uniform(k4, (B, No, 1), jnp.float32, 0.1, 0.5)
    obst_state = jnp.concatenate([obst_pos, obst_r], axis=-1)
    prey_is_alive = jax.random.bernoulli(k5, 0.8, (B, Ny))

    params = init_params(k6)

    fwd = jax.jit(predator_actor_forward)
    out = jax.block_until_ready(fwd(params, pred_state, prey_state, obst_state, prey_is_alive))
    assert out.shape == (B, Np, 1) and out.dtype == jnp.float32
    assert bool(jnp.all(jnp.isfinite(out)))
    print("KERNEL_OK")
</pallas_src>

<mosaic_0001>
module attributes {stable_mosaic.version = 11 : i64} {
  func.func @kernel(%arg0: i32, %arg1: memref<16x128xf32, #tpu.memory_space<vmem>>, %arg2: memref<16x8xf32, #tpu.memory_space<vmem>>, %arg3: memref<7x128x128xbf16, #tpu.memory_space<vmem>>, %arg4: memref<32x128xf32, #tpu.memory_space<vmem>>, %arg5: memref<8x128xf32, #tpu.memory_space<vmem>>) attributes {dimension_semantics = [#tpu.dimension_semantics<parallel>], iteration_bounds = array<i64: 1>, scalar_prefetch = 0 : i64, scratch_operands = 0 : i64, tpu.core_type = #tpu.core_type<tc>, window_params = [{transform_indices = @transform_0, window_bounds = array<i64: 16, 128>}, {transform_indices = @transform_1, window_bounds = array<i64: 16, 8>}, {pipeline_mode = #tpu.pipeline_mode<synchronous>, transform_indices = @transform_2, window_bounds = array<i64: 7, 128, 128>}, {pipeline_mode = #tpu.pipeline_mode<synchronous>, transform_indices = @transform_3, window_bounds = array<i64: 32, 128>}, {transform_indices = @transform_4, window_bounds = array<i64: 8, 128>}]} {
    %c0 = arith.constant 0 : index
    %c0_0 = arith.constant 0 : index
    %0 = vector.load %arg1[%c0, %c0_0] : memref<16x128xf32, #tpu.memory_space<vmem>>, vector<16x128xf32>
    %c0_1 = arith.constant 0 : index
    %c0_2 = arith.constant 0 : index
    %1 = vector.load %arg2[%c0_1, %c0_2] : memref<16x8xf32, #tpu.memory_space<vmem>>, vector<16x8xf32>
    %c0_3 = arith.constant 0 : index
    %c0_4 = arith.constant 0 : index
    %2 = vector.load %arg4[%c0_3, %c0_4] : memref<32x128xf32, #tpu.memory_space<vmem>>, vector<32x128xf32>
    %3 = tpu.iota {dimensions = array<i32: 1>} : vector<16x128xi32>
    %c64_i32 = arith.constant 64 : i32
    %4 = vector.broadcast %c64_i32 : i32 to vector<16x128xi32>
    %5 = arith.cmpi slt, %3, %4 : vector<16x128xi32>
    %6 = vector.extract_strided_slice %1 {offsets = [0, 4], sizes = [16, 1], strides = [1, 1]} : vector<16x8xf32> to vector<16x1xf32>
    %7 = vector.shape_cast %6 : vector<16x1xf32> to vector<16x1xf32>
    %8 = vector.broadcast %7 : vector<16x1xf32> to vector<16x128xf32>
    %9 = vector.extract_strided_slice %1 {offsets = [0, 5], sizes = [16, 1], strides = [1, 1]} : vector<16x8xf32> to vector<16x1xf32>
    %10 = vector.shape_cast %9 : vector<16x1xf32> to vector<16x1xf32>
    %11 = vector.broadcast %10 : vector<16x1xf32> to vector<16x128xf32>
    %12 = arith.select %5, %8, %11 : vector<16x128xi1>, vector<16x128xf32>
    %cst = arith.constant 1.000000e+00 : f32
    %13 = vector.broadcast %cst : f32 to vector<16x128xf32>
    %14 = arith.subf %12, %13 : vector<16x128xf32>
    %cst_5 = arith.constant 1.000000e+30 : f32
    %15 = vector.broadcast %cst_5 : f32 to vector<16x128xf32>
    %16 = arith.mulf %14, %15 : vector<16x128xf32>
    %17 = vector.shape_cast %12 : vector<16x128xf32> to vector<1x16x128xf32>
    %cst_6 = arith.constant dense<0.000000e+00> : vector<1x128xf32>
    %18 = vector.multi_reduction <add>, %17, %cst_6 [1] : vector<1x16x128xf32> to vector<1x128xf32>
    %cst_7 = arith.constant 1.000000e+00 : f32
    %19 = vector.broadcast %cst_7 : f32 to vector<1x128xf32>
    %20 = arith.maximumf %18, %19 : vector<1x128xf32>
    %21 = tpu.reciprocal %20 {approx = true} : vector<1x128xf32> -> vector<1x128xf32>
    %22 = arith.truncf %0 : vector<16x128xf32> to vector<16x128xbf16>
    %c0_8 = arith.constant 0 : index
    %c0_9 = arith.constant 0 : index
    %c0_10 = arith.constant 0 : index
    %23 = vector.load %arg3[%c0_8, %c0_9, %c0_10] : memref<7x128x128xbf16, #tpu.memory_space<vmem>>, vector<1x128x128xbf16>
    %24 = vector.shape_cast %23 : vector<1x128x128xbf16> to vector<128x128xbf16>
    %cst_11 = arith.constant dense<0.000000e+00> : vector<16x128xf32>
    %25 = tpu.matmul %22, %24, %cst_11 {dimension_numbers = #tpu.dot_dimension_numbers<[1], [0], [0], [1], [0, 0, 1, 1], [], []>} : vector<16x128xbf16>, vector<128x128xbf16>, vector<16x128xf32> -> vector<16x128xf32>
    %26 = vector.extract_strided_slice %2 {offsets = [24, 0], sizes = [1, 128], strides = [1, 1]} : vector<32x128xf32> to vector<1x128xf32>
    %27 = vector.broadcast %26 : vector<1x128xf32> to vector<16x128xf32>
    %28 = arith.addf %25, %27 : vector<16x128xf32>
    %29 = vector.extract_strided_slice %1 {offsets = [0, 0], sizes = [16, 1], strides = [1, 1]} : vector<16x8xf32> to vector<16x1xf32>
    %30 = vector.extract_strided_slice %2 {offsets = [0, 0], sizes = [1, 128], strides = [1, 1]} : vector<32x128xf32> to vector<1x128xf32>
    %31 = vector.broadcast %29 : vector<16x1xf32> to vector<16x128xf32>
    %32 = vector.broadcast %30 : vector<1x128xf32> to vector<16x128xf32>
    %33 = arith.mulf %31, %32 : vector<16x128xf32>
    %34 = vector.extract_strided_slice %1 {offsets = [0, 1], sizes = [16, 1], strides = [1, 1]} : vector<16x8xf32> to vector<16x1xf32>
    %35 = vector.extract_strided_slice %2 {offsets = [1, 0], sizes = [1, 128], strides = [1, 1]} : vector<32x128xf32> to vector<1x128xf32>
    %36 = vector.broadcast %34 : vector<16x1xf32> to vector<16x128xf32>
    %37 = vector.broadcast %35 : vector<1x128xf32> to vector<16x128xf32>
    %38 = arith.mulf %36, %37 : vector<16x128xf32>
    %39 = arith.addf %33, %38 : vector<16x128xf32>
    %40 = vector.extract_strided_slice %1 {offsets = [0, 2], sizes = [16, 1], strides = [1, 1]} : vector<16x8xf32> to vector<16x1xf32>
    %41 = vector.extract_strided_slice %2 {offsets = [2, 0], sizes = [1, 128], strides = [1, 1]} : vector<32x128xf32> to vector<1x128xf32>
    %42 = vector.broadcast %40 : vector<16x1xf32> to vector<16x128xf32>
    %43 = vector.broadcast %41 : vector<1x128xf32> to vector<16x128xf32>
    %44 = arith.mulf %42, %43 : vector<16x128xf32>
    %45 = arith.addf %39, %44 : vector<16x128xf32>
    %46 = vector.extract_strided_slice %1 {offsets = [0, 3], sizes = [16, 1], strides = [1, 1]} : vector<16x8xf32> to vector<16x1xf32>
    %47 = vector.extract_strided_slice %2 {offsets = [3, 0], sizes = [1, 128], strides = [1, 1]} : vector<32x128xf32> to vector<1x128xf32>
    %48 = vector.broadcast %46 : vector<16x1xf32> to vector<16x128xf32>
    %49 = vector.broadcast %47 : vector<1x128xf32> to vector<16x128xf32>
    %50 = arith.mulf %48, %49 : vector<16x128xf32>
    %51 = arith.addf %45, %50 : vector<16x128xf32>
    %52 = arith.addf %28, %51 : vector<16x128xf32>
    %53 = arith.addf %52, %16 : vector<16x128xf32>
    %54 = vector.shape_cast %53 : vector<16x128xf32> to vector<1x16x128xf32>
    %55 = vector.shape_cast %51 : vector<16x128xf32> to vector<1x16x128xf32>
    %56 = vector.extract_strided_slice %54 {offsets = [0, 0, 0], sizes = [1, 1, 128], strides = [1, 1, 1]} : vector<1x16x128xf32> to vector<1x1x128xf32>
    %57 = vector.broadcast %56 : vector<1x1x128xf32> to vector<1x16x128xf32>
    %58 = arith.subf %57, %55 : vector<1x16x128xf32>
    %cst_12 = arith.constant 0.000000e+00 : f32
    %59 = vector.broadcast %cst_12 : f32 to vector<1x16x128xf32>
    %60 = arith.maximumf %58, %59 : vector<1x16x128xf32>
    %61 = vector.extract_strided_slice %54 {offsets = [0, 1, 0], sizes = [1, 1, 128], strides = [1, 1, 1]} : vector<1x16x128xf32> to vector<1x1x128xf32>
    %62 = vector.broadcast %61 : vector<1x1x128xf32> to vector<1x16x128xf32>
    %63 = arith.subf %62, %55 : vector<1x16x128xf32>
    %cst_13 = arith.constant 0.000000e+00 : f32
    %64 = vector.broadcast %cst_13 : f32 to vector<1x16x128xf32>
    %65 = arith.maximumf %63, %64 : vector<1x16x128xf32>
    %66 = arith.addf %60, %65 : vector<1x16x128xf32>
    %67 = vector.extract_strided_slice %54 {offsets = [0, 2, 0], sizes = [1, 1, 128], strides = [1, 1, 1]} : vector<1x16x128xf32> to vector<1x1x128xf32>
    %68 = vector.broadcast %67 : vector<1x1x128xf32> to vector<1x16x128xf32>
    %69 = arith.subf %68, %55 : vector<1x16x128xf32>
    %cst_14 = arith.constant 0.000000e+00 : f32
    %70 = vector.broadcast %cst_14 : f32 to vector<1x16x128xf32>
    %71 = arith.maximumf %69, %70 : vector<1x16x128xf32>
    %72 = arith.addf %66, %71 : vector<1x16x128xf32>
    %73 = vector.extract_strided_slice %54 {offsets = [0, 3, 0], sizes = [1, 1, 128], strides = [1, 1, 1]} : vector<1x16x128xf32> to vector<1x1x128xf32>
    %74 = vector.broadcast %73 : vector<1x1x128xf32> to vector<1x16x128xf32>
    %75 = arith.subf %74, %55 : vector<1x16x128xf32>
    %cst_15 = arith.constant 0.000000e+00 : f32
    %76 = vector.broadcast %cst_15 : f32 to vector<1x16x128xf32>
    %77 = arith.maximumf %75, %76 : vector<1x16x128xf32>
    %78 = arith.addf %72, %77 : vector<1x16x128xf32>
    %79 = vector.extract_strided_slice %54 {offsets = [0, 4, 0], sizes = [1, 1, 128], strides = [1, 1, 1]} : vector<1x16x128xf32> to vector<1x1x128xf32>
    %80 = vector.broadcast %79 : vector<1x1x128xf32> to vector<1x16x128xf32>
    %81 = arith.subf %80, %55 : vector<1x16x128xf32>
    %cst_16 = arith.constant 0.000000e+00 : f32
    %82 = vector.broadcast %cst_16 : f32 to vector<1x16x128xf32>
    %83 = arith.maximumf %81, %82 : vector<1x16x128xf32>
    %84 = arith.addf %78, %83 : vector<1x16x128xf32>
    %85 = vector.extract_strided_slice %54 {offsets = [0, 5, 0], sizes = [1, 1, 128], strides = [1, 1, 1]} : vector<1x16x128xf32> to vector<1x1x128xf32>
    %86 = vector.broadcast %85 : vector<1x1x128xf32> to vector<1x16x128xf32>
    %87 = arith.subf %86, %55 : vector<1x16x128xf32>
    %cst_17 = arith.constant 0.000000e+00 : f32
    %88 = vector.broadcast %cst_17 : f32 to vector<1x16x128xf32>
    %89 = arith.maximumf %87, %88 : vector<1x16x128xf32>
    %90 = arith.addf %84, %89 : vector<1x16x128xf32>
    %91 = vector.extract_strided_slice %54 {offsets = [0, 6, 0], sizes = [1, 1, 128], strides = [1, 1, 1]} : vector<1x16x128xf32> to vector<1x1x128xf32>
    %92 = vector.broadcast %91 : vector<1x1x128xf32> to vector<1x16x128xf32>
    %93 = arith.subf %92, %55 : vector<1x16x128xf32>
    %cst_18 = arith.constant 0.000000e+00 : f32
    %94 = vector.broadcast %cst_18 : f32 to vector<1x16x128xf32>
    %95 = arith.maximumf %93, %94 : vector<1x16x128xf32>
    %96 = arith.addf %90, %95 : vector<1x16x128xf32>
    %97 = vector.extract_strided_slice %54 {offsets = [0, 7, 0], sizes = [1, 1, 128], strides = [1, 1, 1]} : vector<1x16x128xf32> to vector<1x1x128xf32>
    %98 = vector.broadcast %97 : vector<1x1x128xf32> to vector<1x16x128xf32>
    %99 = arith.subf %98, %55 : vector<1x16x128xf32>
    %cst_19 = arith.constant 0.000000e+00 : f32
    %100 = vector.broadcast %cst_19 : f32 to vector<1x16x128xf32>
    %101 = arith.maximumf %99, %100 : vector<1x16x128xf32>
    %102 = arith.addf %96, %101 : vector<1x16x128xf32>
    %103 = vector.extract_strided_slice %54 {offsets = [0, 8, 0], sizes = [1, 1, 128], strides = [1, 1, 1]} : vector<1x16x128xf32> to vector<1x1x128xf32>
    %104 = vector.broadcast %103 : vector<1x1x128xf32> to vector<1x16x128xf32>
    %105 = arith.subf %104, %55 : vector<1x16x128xf32>
    %cst_20 = arith.constant 0.000000e+00 : f32
    %106 = vector.broadcast %cst_20 : f32 to vector<1x16x128xf32>
    %107 = arith.maximumf %105, %106 : vector<1x16x128xf32>
    %108 = arith.addf %102, %107 : vector<1x16x128xf32>
    %109 = vector.extract_strided_slice %54 {offsets = [0, 9, 0], sizes = [1, 1, 128], strides = [1, 1, 1]} : vector<1x16x128xf32> to vector<1x1x128xf32>
    %110 = vector.broadcast %109 : vector<1x1x128xf32> to vector<1x16x128xf32>
    %111 = arith.subf %110, %55 : vector<1x16x128xf32>
    %cst_21 = arith.constant 0.000000e+00 : f32
    %112 = vector.broadcast %cst_21 : f32 to vector<1x16x128xf32>
    %113 = arith.maximumf %111, %112 : vector<1x16x128xf32>
    %114 = arith.addf %108, %113 : vector<1x16x128xf32>
    %115 = vector.extract_strided_slice %54 {offsets = [0, 10, 0], sizes = [1, 1, 128], strides = [1, 1, 1]} : vector<1x16x128xf32> to vector<1x1x128xf32>
    %116 = vector.broadcast %115 : vector<1x1x128xf32> to vector<1x16x128xf32>
    %117 = arith.subf %116, %55 : vector<1x16x128xf32>
    %cst_22 = arith.constant 0.000000e+00 : f32
    %118 = vector.broadcast %cst_22 : f32 to vector<1x16x128xf32>
    %119 = arith.maximumf %117, %118 : vector<1x16x128xf32>
    %120 = arith.addf %114, %119 : vector<1x16x128xf32>
    %121 = vector.extract_strided_slice %54 {offsets = [0, 11, 0], sizes = [1, 1, 128], strides = [1, 1, 1]} : vector<1x16x128xf32> to vector<1x1x128xf32>
    %122 = vector.broadcast %121 : vector<1x1x128xf32> to vector<1x16x128xf32>
    %123 = arith.subf %122, %55 : vector<1x16x128xf32>
    %cst_23 = arith.constant 0.000000e+00 : f32
    %124 = vector.broadcast %cst_23 : f32 to vector<1x16x128xf32>
    %125 = arith.maximumf %123, %124 : vector<1x16x128xf32>
    %126 = arith.addf %120, %125 : vector<1x16x128xf32>
    %127 = vector.extract_strided_slice %54 {offsets = [0, 12, 0], sizes = [1, 1, 128], strides = [1, 1, 1]} : vector<1x16x128xf32> to vector<1x1x128xf32>
    %128 = vector.broadcast %127 : vector<1x1x128xf32> to vector<1x16x128xf32>
    %129 = arith.subf %128, %55 : vector<1x16x128xf32>
    %cst_24 = arith.constant 0.000000e+00 : f32
    %130 = vector.broadcast %cst_24 : f32 to vector<1x16x128xf32>
    %131 = arith.maximumf %129, %130 : vector<1x16x128xf32>
    %132 = arith.addf %126, %131 : vector<1x16x128xf32>
    %133 = vector.extract_strided_slice %54 {offsets = [0, 13, 0], sizes = [1, 1, 128], strides = [1, 1, 1]} : vector<1x16x128xf32> to vector<1x1x128xf32>
    %134 = vector.broadcast %133 : vector<1x1x128xf32> to vector<1x16x128xf32>
    %135 = arith.subf %134, %55 : vector<1x16x128xf32>
    %cst_25 = arith.constant 0.000000e+00 : f32
    %136 = vector.broadcast %cst_25 : f32 to vector<1x16x128xf32>
    %137 = arith.maximumf %135, %136 : vector<1x16x128xf32>
    %138 = arith.addf %132, %137 : vector<1x16x128xf32>
    %139 = vector.extract_strided_slice %54 {offsets = [0, 14, 0], sizes = [1, 1, 128], strides = [1, 1, 1]} : vector<1x16x128xf32> to vector<1x1x128xf32>
    %140 = vector.broadcast %139 : vector<1x1x128xf32> to vector<1x16x128xf32>
    %141 = arith.subf %140, %55 : vector<1x16x128xf32>
    %cst_26 = arith.constant 0.000000e+00 : f32
    %142 = vector.broadcast %cst_26 : f32 to vector<1x16x128xf32>
    %143 = arith.maximumf %141, %142 : vector<1x16x128xf32>
    %144 = arith.addf %138, %143 : vector<1x16x128xf32>
    %145 = vector.extract_strided_slice %54 {offsets = [0, 15, 0], sizes = [1, 1, 128], strides = [1, 1, 1]} : vector<1x16x128xf32> to vector<1x1x128xf32>
    %146 = vector.broadcast %145 : vector<1x1x128xf32> to vector<1x16x128xf32>
    %147 = arith.subf %146, %55 : vector<1x16x128xf32>
    %cst_27 = arith.constant 0.000000e+00 : f32
    %148 = vector.broadcast %cst_27 : f32 to vector<1x16x128xf32>
    %149 = arith.maximumf %147, %148 : vector<1x16x128xf32>
    %150 = arith.addf %144, %149 : vector<1x16x128xf32>
    %151 = vector.shape_cast %21 : vector<1x128xf32> to vector<1x1x128xf32>
    %152 = vector.broadcast %151 : vector<1x1x128xf32> to vector<1x16x128xf32>
    %153 = arith.mulf %150, %152 : vector<1x16x128xf32>
    %154 = vector.shape_cast %153 : vector<1x16x128xf32> to vector<16x128xf32>
    %155 = arith.truncf %154 : vector<16x128xf32> to vector<16x128xbf16>
    %c1 = arith.constant 1 : index
    %c0_28 = arith.constant 0 : index
    %c0_29 = arith.constant 0 : index
    %156 = vector.load %arg3[%c1, %c0_28, %c0_29] : memref<7x128x128xbf16, #tpu.memory_space<vmem>>, vector<1x128x128xbf16>
    %157 = vector.shape_cast %156 : vector<1x128x128xbf16> to vector<128x128xbf16>
    %cst_30 = arith.constant dense<0.000000e+00> : vector<16x128xf32>
    %158 = tpu.matmul %155, %157, %cst_30 {dimension_numbers = #tpu.dot_dimension_numbers<[1], [0], [0], [1], [0, 0, 1, 1], [], []>} : vector<16x128xbf16>, vector<128x128xbf16>, vector<16x128xf32> -> vector<16x128xf32>
    %159 = vector.extract_strided_slice %2 {offsets = [25, 0], sizes = [1, 128], strides = [1, 1]} : vector<32x128xf32> to vector<1x128xf32>
    %160 = vector.broadcast %159 : vector<1x128xf32> to vector<16x128xf32>
    %161 = arith.addf %158, %160 : vector<16x128xf32>
    %162 = arith.addf %161, %0 : vector<16x128xf32>
    %cst_31 = arith.constant 0.000000e+00 : f32
    %163 = vector.broadcast %cst_31 : f32 to vector<16x128xf32>
    %164 = arith.maximumf %162, %163 : vector<16x128xf32>
    %165 = arith.mulf %164, %12 : vector<16x128xf32>
    %166 = arith.truncf %165 : vector<16x128xf32> to vector<16x128xbf16>
    %c2 = arith.constant 2 : index
    %c0_32 = arith.constant 0 : index
    %c0_33 = arith.constant 0 : index
    %167 = vector.load %arg3[%c2, %c0_32, %c0_33] : memref<7x128x128xbf16, #tpu.memory_space<vmem>>, vector<1x128x128xbf16>
    %168 = vector.shape_cast %167 : vector<1x128x128xbf16> to vector<128x128xbf16>
    %cst_34 = arith.constant dense<0.000000e+00> : vector<16x128xf32>
    %169 = tpu.matmul %166, %168, %cst_34 {dimension_numbers = #tpu.dot_dimension_numbers<[1], [0], [0], [1], [0, 0, 1, 1], [], []>} : vector<16x128xbf16>, vector<128x128xbf16>, vector<16x128xf32> -> vector<16x128xf32>
    %170 = vector.extract_strided_slice %2 {offsets = [26, 0], sizes = [1, 128], strides = [1, 1]} : vector<32x128xf32> to vector<1x128xf32>
    %171 = vector.broadcast %170 : vector<1x128xf32> to vector<16x128xf32>
    %172 = arith.addf %169, %171 : vector<16x128xf32>
    %173 = vector.extract_strided_slice %1 {offsets = [0, 0], sizes = [16, 1], strides = [1, 1]} : vector<16x8xf32> to vector<16x1xf32>
    %174 = vector.extract_strided_slice %2 {offsets = [8, 0], sizes = [1, 128], strides = [1, 1]} : vector<32x128xf32> to vector<1x128xf32>
    %175 = vector.broadcast %173 : vector<16x1xf32> to vector<16x128xf32>
    %176 = vector.broadcast %174 : vector<1x128xf32> to vector<16x128xf32>
    %177 = arith.mulf %175, %176 : vector<16x128xf32>
    %178 = vector.extract_strided_slice %1 {offsets = [0, 1], sizes = [16, 1], strides = [1, 1]} : vector<16x8xf32> to vector<16x1xf32>
    %179 = vector.extract_strided_slice %2 {offsets = [9, 0], sizes = [1, 128], strides = [1, 1]} : vector<32x128xf32> to vector<1x128xf32>
    %180 = vector.broadcast %178 : vector<16x1xf32> to vector<16x128xf32>
    %181 = vector.broadcast %179 : vector<1x128xf32> to vector<16x128xf32>
    %182 = arith.mulf %180, %181 : vector<16x128xf32>
    %183 = arith.addf %177, %182 : vector<16x128xf32>
    %184 = vector.extract_strided_slice %1 {offsets = [0, 2], sizes = [16, 1], strides = [1, 1]} : vector<16x8xf32> to vector<16x1xf32>
    %185 = vector.extract_strided_slice %2 {offsets = [10, 0], sizes = [1, 128], strides = [1, 1]} : vector<32x128xf32> to vector<1x128xf32>
    %186 = vector.broadcast %184 : vector<16x1xf32> to vector<16x128xf32>
    %187 = vector.broadcast %185 : vector<1x128xf32> to vector<16x128xf32>
    %188 = arith.mulf %186, %187 : vector<16x128xf32>
    %189 = arith.addf %183, %188 : vector<16x128xf32>
    %190 = vector.extract_strided_slice %1 {offsets = [0, 3], sizes = [16, 1], strides = [1, 1]} : vector<16x8xf32> to vector<16x1xf32>
    %191 = vector.extract_strided_slice %2 {offsets = [11, 0], sizes = [1, 128], strides = [1, 1]} : vector<32x128xf32> to vector<1x128xf32>
    %192 = vector.broadcast %190 : vector<16x1xf32> to vector<16x128xf32>
    %193 = vector.broadcast %191 : vector<1x128xf32> to vector<16x128xf32>
    %194 = arith.mulf %192, %193 : vector<16x128xf32>
    %195 = arith.addf %189, %194 : vector<16x128xf32>
    %196 = arith.addf %172, %195 : vector<16x128xf32>
    %197 = arith.addf %196, %16 : vector<16x128xf32>
    %198 = vector.shape_cast %197 : vector<16x128xf32> to vector<1x16x128xf32>
    %199 = vector.shape_cast %195 : vector<16x128xf32> to vector<1x16x128xf32>
    %200 = vector.extract_strided_slice %198 {offsets = [0, 0, 0], sizes = [1, 1, 128], strides = [1, 1, 1]} : vector<1x16x128xf32> to vector<1x1x128xf32>
    %201 = vector.broadcast %200 : vector<1x1x128xf32> to vector<1x16x128xf32>
    %202 = arith.subf %201, %199 : vector<1x16x128xf32>
    %cst_35 = arith.constant 0.000000e+00 : f32
    %203 = vector.broadcast %cst_35 : f32 to vector<1x16x128xf32>
    %204 = arith.maximumf %202, %203 : vector<1x16x128xf32>
    %205 = vector.extract_strided_slice %198 {offsets = [0, 1, 0], sizes = [1, 1, 128], strides = [1, 1, 1]} : vector<1x16x128xf32> to vector<1x1x128xf32>
    %206 = vector.broadcast %205 : vector<1x1x128xf32> to vector<1x16x128xf32>
    %207 = arith.subf %206, %199 : vector<1x16x128xf32>
    %cst_36 = arith.constant 0.000000e+00 : f32
    %208 = vector.broadcast %cst_36 : f32 to vector<1x16x128xf32>
    %209 = arith.maximumf %207, %208 : vector<1x16x128xf32>
    %210 = arith.addf %204, %209 : vector<1x16x128xf32>
    %211 = vector.extract_strided_slice %198 {offsets = [0, 2, 0], sizes = [1, 1, 128], strides = [1, 1, 1]} : vector<1x16x128xf32> to vector<1x1x128xf32>
    %212 = vector.broadcast %211 : vector<1x1x128xf32> to vector<1x16x128xf32>
    %213 = arith.subf %212, %199 : vector<1x16x128xf32>
    %cst_37 = arith.constant 0.000000e+00 : f32
    %214 = vector.broadcast %cst_37 : f32 to vector<1x16x128xf32>
    %215 = arith.maximumf %213, %214 : vector<1x16x128xf32>
    %216 = arith.addf %210, %215 : vector<1x16x128xf32>
    %217 = vector.extract_strided_slice %198 {offsets = [0, 3, 0], sizes = [1, 1, 128], strides = [1, 1, 1]} : vector<1x16x128xf32> to vector<1x1x128xf32>
    %218 = vector.broadcast %217 : vector<1x1x128xf32> to vector<1x16x128xf32>
    %219 = arith.subf %218, %199 : vector<1x16x128xf32>
    %cst_38 = arith.constant 0.000000e+00 : f32
    %220 = vector.broadcast %cst_38 : f32 to vector<1x16x128xf32>
    %221 = arith.maximumf %219, %220 : vector<1x16x128xf32>
    %222 = arith.addf %216, %221 : vector<1x16x128xf32>
    %223 = vector.extract_strided_slice %198 {offsets = [0, 4, 0], sizes = [1, 1, 128], strides = [1, 1, 1]} : vector<1x16x128xf32> to vector<1x1x128xf32>
    %224 = vector.broadcast %223 : vector<1x1x128xf32> to vector<1x16x128xf32>
    %225 = arith.subf %224, %199 : vector<1x16x128xf32>
    %cst_39 = arith.constant 0.000000e+00 : f32
    %226 = vector.broadcast %cst_39 : f32 to vector<1x16x128xf32>
    %227 = arith.maximumf %225, %226 : vector<1x16x128xf32>
    %228 = arith.addf %222, %227 : vector<1x16x128xf32>
    %229 = vector.extract_strided_slice %198 {offsets = [0, 5, 0], sizes = [1, 1, 128], strides = [1, 1, 1]} : vector<1x16x128xf32> to vector<1x1x128xf32>
    %230 = vector.broadcast %229 : vector<1x1x128xf32> to vector<1x16x128xf32>
    %231 = arith.subf %230, %199 : vector<1x16x128xf32>
    %cst_40 = arith.constant 0.000000e+00 : f32
    %232 = vector.broadcast %cst_40 : f32 to vector<1x16x128xf32>
    %233 = arith.maximumf %231, %232 : vector<1x16x128xf32>
    %234 = arith.addf %228, %233 : vector<1x16x128xf32>
    %235 = vector.extract_strided_slice %198 {offsets = [0, 6, 0], sizes = [1, 1, 128], strides = [1, 1, 1]} : vector<1x16x128xf32> to vector<1x1x128xf32>
    %236 = vector.broadcast %235 : vector<1x1x128xf32> to vector<1x16x128xf32>
    %237 = arith.subf %236, %199 : vector<1x16x128xf32>
    %cst_41 = arith.constant 0.000000e+00 : f32
    %238 = vector.broadcast %cst_41 : f32 to vector<1x16x128xf32>
    %239 = arith.maximumf %237, %238 : vector<1x16x128xf32>
    %240 = arith.addf %234, %239 : vector<1x16x128xf32>
    %241 = vector.extract_strided_slice %198 {offsets = [0, 7, 0], sizes = [1, 1, 128], strides = [1, 1, 1]} : vector<1x16x128xf32> to vector<1x1x128xf32>
    %242 = vector.broadcast %241 : vector<1x1x128xf32> to vector<1x16x128xf32>
    %243 = arith.subf %242, %199 : vector<1x16x128xf32>
    %cst_42 = arith.constant 0.000000e+00 : f32
    %244 = vector.broadcast %cst_42 : f32 to vector<1x16x128xf32>
    %245 = arith.maximumf %243, %244 : vector<1x16x128xf32>
    %246 = arith.addf %240, %245 : vector<1x16x128xf32>
    %247 = vector.extract_strided_slice %198 {offsets = [0, 8, 0], sizes = [1, 1, 128], strides = [1, 1, 1]} : vector<1x16x128xf32> to vector<1x1x128xf32>
    %248 = vector.broadcast %247 : vector<1x1x128xf32> to vector<1x16x128xf32>
    %249 = arith.subf %248, %199 : vector<1x16x128xf32>
    %cst_43 = arith.constant 0.000000e+00 : f32
    %250 = vector.broadcast %cst_43 : f32 to vector<1x16x128xf32>
    %251 = arith.maximumf %249, %250 : vector<1x16x128xf32>
    %252 = arith.addf %246, %251 : vector<1x16x128xf32>
    %253 = vector.extract_strided_slice %198 {offsets = [0, 9, 0], sizes = [1, 1, 128], strides = [1, 1, 1]} : vector<1x16x128xf32> to vector<1x1x128xf32>
    %254 = vector.broadcast %253 : vector<1x1x128xf32> to vector<1x16x128xf32>
    %255 = arith.subf %254, %199 : vector<1x16x128xf32>
    %cst_44 = arith.constant 0.000000e+00 : f32
    %256 = vector.broadcast %cst_44 : f32 to vector<1x16x128xf32>
    %257 = arith.maximumf %255, %256 : vector<1x16x128xf32>
    %258 = arith.addf %252, %257 : vector<1x16x128xf32>
    %259 = vector.extract_strided_slice %198 {offsets = [0, 10, 0], sizes = [1, 1, 128], strides = [1, 1, 1]} : vector<1x16x128xf32> to vector<1x1x128xf32>
    %260 = vector.broadcast %259 : vector<1x1x128xf32> to vector<1x16x128xf32>
    %261 = arith.subf %260, %199 : vector<1x16x128xf32>
    %cst_45 = arith.constant 0.000000e+00 : f32
    %262 = vector.broadcast %cst_45 : f32 to vector<1x16x128xf32>
    %263 = arith.maximumf %261, %262 : vector<1x16x128xf32>
    %264 = arith.addf %258, %263 : vector<1x16x128xf32>
    %265 = vector.extract_strided_slice %198 {offsets = [0, 11, 0], sizes = [1, 1, 128], strides = [1, 1, 1]} : vector<1x16x128xf32> to vector<1x1x128xf32>
    %266 = vector.broadcast %265 : vector<1x1x128xf32> to vector<1x16x128xf32>
    %267 = arith.subf %266, %199 : vector<1x16x128xf32>
    %cst_46 = arith.constant 0.000000e+00 : f32
    %268 = vector.broadcast %cst_46 : f32 to vector<1x16x128xf32>
    %269 = arith.maximumf %267, %268 : vector<1x16x128xf32>
    %270 = arith.addf %264, %269 : vector<1x16x128xf32>
    %271 = vector.extract_strided_slice %198 {offsets = [0, 12, 0], sizes = [1, 1, 128], strides = [1, 1, 1]} : vector<1x16x128xf32> to vector<1x1x128xf32>
    %272 = vector.broadcast %271 : vector<1x1x128xf32> to vector<1x16x128xf32>
    %273 = arith.subf %272, %199 : vector<1x16x128xf32>
    %cst_47 = arith.constant 0.000000e+00 : f32
    %274 = vector.broadcast %cst_47 : f32 to vector<1x16x128xf32>
    %275 = arith.maximumf %273, %274 : vector<1x16x128xf32>
    %276 = arith.addf %270, %275 : vector<1x16x128xf32>
    %277 = vector.extract_strided_slice %198 {offsets = [0, 13, 0], sizes = [1, 1, 128], strides = [1, 1, 1]} : vector<1x16x128xf32> to vector<1x1x128xf32>
    %278 = vector.broadcast %277 : vector<1x1x128xf32> to vector<1x16x128xf32>
    %279 = arith.subf %278, %199 : vector<1x16x128xf32>
    %cst_48 = arith.constant 0.000000e+00 : f32
    %280 = vector.broadcast %cst_48 : f32 to vector<1x16x128xf32>
    %281 = arith.maximumf %279, %280 : vector<1x16x128xf32>
    %282 = arith.addf %276, %281 : vector<1x16x128xf32>
    %283 = vector.extract_strided_slice %198 {offsets = [0, 14, 0], sizes = [1, 1, 128], strides = [1, 1, 1]} : vector<1x16x128xf32> to vector<1x1x128xf32>
    %284 = vector.broadcast %283 : vector<1x1x128xf32> to vector<1x16x128xf32>
    %285 = arith.subf %284, %199 : vector<1x16x128xf32>
    %cst_49 = arith.constant 0.000000e+00 : f32
    %286 = vector.broadcast %cst_49 : f32 to vector<1x16x128xf32>
    %287 = arith.maximumf %285, %286 : vector<1x16x128xf32>
    %288 = arith.addf %282, %287 : vector<1x16x128xf32>
    %289 = vector.extract_strided_slice %198 {offsets = [0, 15, 0], sizes = [1, 1, 128], strides = [1, 1, 1]} : vector<1x16x128xf32> to vector<1x1x128xf32>
    %290 = vector.broadcast %289 : vector<1x1x128xf32> to vector<1x16x128xf32>
    %291 = arith.subf %290, %199 : vector<1x16x128xf32>
    %cst_50 = arith.constant 0.000000e+00 : f32
    %292 = vector.broadcast %cst_50 : f32 to vector<1x16x128xf32>
    %293 = arith.maximumf %291, %292 : vector<1x16x128xf32>
    %294 = arith.addf %288, %293 : vector<1x16x128xf32>
    %295 = vector.shape_cast %21 : vector<1x128xf32> to vector<1x1x128xf32>
    %296 = vector.broadcast %295 : vector<1x1x128xf32> to vector<1x16x128xf32>
    %297 = arith.mulf %294, %296 : vector<1x16x128xf32>
    %298 = vector.shape_cast %297 : vector<1x16x128xf32> to vector<16x128xf32>
    %299 = arith.truncf %298 : vector<16x128xf32> to vector<16x128xbf16>
    %c3 = arith.constant 3 : index
    %c0_51 = arith.constant 0 : index
    %c0_52 = arith.constant 0 : index
    %300 = vector.load %arg3[%c3, %c0_51, %c0_52] : memref<7x128x128xbf16, #tpu.memory_space<vmem>>, vector<1x128x128xbf16>
    %301 = vector.shape_cast %300 : vector<1x128x128xbf16> to vector<128x128xbf16>
    %cst_53 = arith.constant dense<0.000000e+00> : vector<16x128xf32>
    %302 = tpu.matmul %299, %301, %cst_53 {dimension_numbers = #tpu.dot_dimension_numbers<[1], [0], [0], [1], [0, 0, 1, 1], [], []>} : vector<16x128xbf16>, vector<128x128xbf16>, vector<16x128xf32> -> vector<16x128xf32>
    %303 = vector.extract_strided_slice %2 {offsets = [27, 0], sizes = [1, 128], strides = [1, 1]} : vector<32x128xf32> to vector<1x128xf32>
    %304 = vector.broadcast %303 : vector<1x128xf32> to vector<16x128xf32>
    %305 = arith.addf %302, %304 : vector<16x128xf32>
    %306 = arith.addf %305, %165 : vector<16x128xf32>
    %cst_54 = arith.constant 0.000000e+00 : f32
    %307 = vector.broadcast %cst_54 : f32 to vector<16x128xf32>
    %308 = arith.maximumf %306, %307 : vector<16x128xf32>
    %309 = vector.extract_strided_slice %1 {offsets = [0, 0], sizes = [16, 1], strides = [1, 1]} : vector<16x8xf32> to vector<16x1xf32>
    %310 = vector.extract_strided_slice %2 {offsets = [16, 0], sizes = [1, 128], strides = [1, 1]} : vector<32x128xf32> to vector<1x128xf32>
    %311 = vector.broadcast %309 : vector<16x1xf32> to vector<16x128xf32>
    %312 = vector.broadcast %310 : vector<1x128xf32> to vector<16x128xf32>
    %313 = arith.mulf %311, %312 : vector<16x128xf32>
    %314 = vector.extract_strided_slice %1 {offsets = [0, 1], sizes = [16, 1], strides = [1, 1]} : vector<16x8xf32> to vector<16x1xf32>
    %315 = vector.extract_strided_slice %2 {offsets = [17, 0], sizes = [1, 128], strides = [1, 1]} : vector<32x128xf32> to vector<1x128xf32>
    %316 = vector.broadcast %314 : vector<16x1xf32> to vector<16x128xf32>
    %317 = vector.broadcast %315 : vector<1x128xf32> to vector<16x128xf32>
    %318 = arith.mulf %316, %317 : vector<16x128xf32>
    %319 = arith.addf %313, %318 : vector<16x128xf32>
    %320 = vector.extract_strided_slice %1 {offsets = [0, 2], sizes = [16, 1], strides = [1, 1]} : vector<16x8xf32> to vector<16x1xf32>
    %321 = vector.extract_strided_slice %2 {offsets = [18, 0], sizes = [1, 128], strides = [1, 1]} : vector<32x128xf32> to vector<1x128xf32>
    %322 = vector.broadcast %320 : vector<16x1xf32> to vector<16x128xf32>
    %323 = vector.broadcast %321 : vector<1x128xf32> to vector<16x128xf32>
    %324 = arith.mulf %322, %323 : vector<16x128xf32>
    %325 = arith.addf %319, %324 : vector<16x128xf32>
    %326 = vector.extract_strided_slice %1 {offsets = [0, 3], sizes = [16, 1], strides = [1, 1]} : vector<16x8xf32> to vector<16x1xf32>
    %327 = vector.extract_strided_slice %2 {offsets = [19, 0], sizes = [1, 128], strides = [1, 1]} : vector<32x128xf32> to vector<1x128xf32>
    %328 = vector.broadcast %326 : vector<16x1xf32> to vector<16x128xf32>
    %329 = vector.broadcast %327 : vector<1x128xf32> to vector<16x128xf32>
    %330 = arith.mulf %328, %329 : vector<16x128xf32>
    %331 = arith.addf %325, %330 : vector<16x128xf32>
    %332 = arith.addf %308, %331 : vector<16x128xf32>
    %333 = vector.extract_strided_slice %2 {offsets = [28, 0], sizes = [1, 128], strides = [1, 1]} : vector<32x128xf32> to vector<1x128xf32>
    %334 = vector.broadcast %333 : vector<1x128xf32> to vector<16x128xf32>
    %335 = arith.addf %332, %334 : vector<16x128xf32>
    %336 = vector.shape_cast %335 : vector<16x128xf32> to vector<1x16x128xf32>
    %337 = vector.extract_strided_slice %336 {offsets = [0, 0, 0], sizes = [1, 8, 128], strides = [1, 1, 1]} : vector<1x16x128xf32> to vector<1x8x128xf32>
    %338 = vector.shape_cast %337 : vector<1x8x128xf32> to vector<8x128xf32>
    %339 = arith.truncf %338 : vector<8x128xf32> to vector<8x128xbf16>
    %c4 = arith.constant 4 : index
    %c0_55 = arith.constant 0 : index
    %c0_56 = arith.constant 0 : index
    %340 = vector.load %arg3[%c4, %c0_55, %c0_56] : memref<7x128x128xbf16, #tpu.memory_space<vmem>>, vector<1x128x128xbf16>
    %341 = vector.shape_cast %340 : vector<1x128x128xbf16> to vector<128x128xbf16>
    %cst_57 = arith.constant dense<0.000000e+00> : vector<8x128xf32>
    %342 = tpu.matmul %339, %341, %cst_57 {dimension_numbers = #tpu.dot_dimension_numbers<[1], [0], [0], [1], [0, 0, 1, 1], [], []>} : vector<8x128xbf16>, vector<128x128xbf16>, vector<8x128xf32> -> vector<8x128xf32>
    %343 = vector.extract_strided_slice %2 {offsets = [29, 0], sizes = [1, 128], strides = [1, 1]} : vector<32x128xf32> to vector<1x128xf32>
    %344 = vector.broadcast %343 : vector<1x128xf32> to vector<8x128xf32>
    %345 = arith.addf %342, %344 : vector<8x128xf32>
    %cst_58 = arith.constant 0.000000e+00 : f32
    %346 = vector.broadcast %cst_58 : f32 to vector<8x128xf32>
    %347 = arith.maximumf %345, %346 : vector<8x128xf32>
    %348 = arith.truncf %347 : vector<8x128xf32> to vector<8x128xbf16>
    %c5 = arith.constant 5 : index
    %c0_59 = arith.constant 0 : index
    %c0_60 = arith.constant 0 : index
    %349 = vector.load %arg3[%c5, %c0_59, %c0_60] : memref<7x128x128xbf16, #tpu.memory_space<vmem>>, vector<1x128x128xbf16>
    %350 = vector.shape_cast %349 : vector<1x128x128xbf16> to vector<128x128xbf16>
    %cst_61 = arith.constant dense<0.000000e+00> : vector<8x128xf32>
    %351 = tpu.matmul %348, %350, %cst_61 {dimension_numbers = #tpu.dot_dimension_numbers<[1], [0], [0], [1], [0, 0, 1, 1], [], []>} : vector<8x128xbf16>, vector<128x128xbf16>, vector<8x128xf32> -> vector<8x128xf32>
    %352 = vector.extract_strided_slice %2 {offsets = [30, 0], sizes = [1, 128], strides = [1, 1]} : vector<32x128xf32> to vector<1x128xf32>
    %353 = vector.broadcast %352 : vector<1x128xf32> to vector<8x128xf32>
    %354 = arith.addf %351, %353 : vector<8x128xf32>
    %cst_62 = arith.constant 0.000000e+00 : f32
    %355 = vector.broadcast %cst_62 : f32 to vector<8x128xf32>
    %356 = arith.maximumf %354, %355 : vector<8x128xf32>
    %357 = arith.truncf %356 : vector<8x128xf32> to vector<8x128xbf16>
    %c6 = arith.constant 6 : index
    %c0_63 = arith.constant 0 : index
    %c0_64 = arith.constant 0 : index
    %358 = vector.load %arg3[%c6, %c0_63, %c0_64] : memref<7x128x128xbf16, #tpu.memory_space<vmem>>, vector<1x128x128xbf16>
    %359 = vector.shape_cast %358 : vector<1x128x128xbf16> to vector<128x128xbf16>
    %cst_65 = arith.constant dense<0.000000e+00> : vector<8x128xf32>
    %360 = tpu.matmul %357, %359, %cst_65 {dimension_numbers = #tpu.dot_dimension_numbers<[1], [0], [0], [1], [0, 0, 1, 1], [], []>} : vector<8x128xbf16>, vector<128x128xbf16>, vector<8x128xf32> -> vector<8x128xf32>
    %361 = vector.extract_strided_slice %2 {offsets = [31, 0], sizes = [1, 128], strides = [1, 1]} : vector<32x128xf32> to vector<1x128xf32>
    %362 = vector.broadcast %361 : vector<1x128xf32> to vector<8x128xf32>
    %363 = arith.addf %360, %362 : vector<8x128xf32>
    %364 = math.tanh %363 : vector<8x128xf32>
    %c0_66 = arith.constant 0 : index
    %c0_67 = arith.constant 0 : index
    %365 = vector.load %arg5[%c0_66, %c0_67] : memref<8x128xf32, #tpu.memory_space<vmem>>, vector<8x128xf32>
    tpu.vector_store %arg5[%c0_66, %c0_67], %364 {strides = array<i32>} : memref<8x128xf32, #tpu.memory_space<vmem>>, vector<8x128xf32>,
    return
  }
  func.func @transform_0(%arg0: i32) -> (i32, i32) {
    %c0_i32 = arith.constant 0 : i32
    %c0_i32_0 = arith.constant 0 : i32
    return %arg0, %c0_i32 : i32, i32
  }
  func.func @transform_1(%arg0: i32) -> (i32, i32) {
    %c0_i32 = arith.constant 0 : i32
    %c0_i32_0 = arith.constant 0 : i32
    return %arg0, %c0_i32 : i32, i32
  }
  func.func @transform_2(%arg0: i32) -> (i32, i32, i32) {
    %c0_i32 = arith.constant 0 : i32
    %c0_i32_0 = arith.constant 0 : i32
    %c0_i32_1 = arith.constant 0 : i32
    %c0_i32_2 = arith.constant 0 : i32
    return %c0_i32, %c0_i32_0, %c0_i32_1 : i32, i32, i32
  }
  func.func @transform_3(%arg0: i32) -> (i32, i32) {
    %c0_i32 = arith.constant 0 : i32
    %c0_i32_0 = arith.constant 0 : i32
    %c0_i32_1 = arith.constant 0 : i32
    return %c0_i32, %c0_i32_0 : i32, i32
  }
  func.func @transform_4(%arg0: i32) -> (i32, i32) {
    %c0_i32 = arith.constant 0 : i32
    %c0_i32_0 = arith.constant 0 : i32
    return %arg0, %c0_i32 : i32, i32
  }
}

</mosaic_0001>

<llo_original>
// kernel: predator_actor_forward.1
$region0: #{predator_actor_forward.1}
  #allocation0 [shape = 'u32[]', space=smem, size = 0x4, offset = 0x4, fixed_abs, tag = 'smem constant byte address 0x4 - core index']
  #allocation1 [shape = 'u32[144,128]{1,0:T(1,128)}', space=vmem, size = 0x12000, scoped, tag = 'internal scratch']
  %s0 = inlined_call_operand.vmem [shape: f32[16,128], index: 0, kind: input, shape index: {}]
  %s1 = inlined_call_operand.vmem [shape: f32[16,8], index: 1, kind: input, shape index: {}]
  %s2 = inlined_call_operand.vmem [shape: bf16[7,128,128], index: 2, kind: input, shape index: {}]
  %s3 = inlined_call_operand.vmem [shape: f32[32,128], index: 3, kind: input, shape index: {}]
  %s4 = inlined_call_operand.vmem [shape: f32[8,128], index: 4, kind: output, shape index: {}]
  %s5 = sld [smem:[#allocation0]]
  $region26: #{predator_actor_forward.1} parent=0
    _
  %s7 = ssub.s32 1, %s5
  %s8 = scalar_select 0, %s7, %s5
  // Predicated region
  $region2: #{predator_actor_forward.1} parent=0 // pred_check
    _
  $region3: #{predator_actor_forward.1} parent=0 // pred_check_branch
    %10 = sbr.rel (0) target = $region5
  $region4: #{predator_actor_forward.1} parent=0 // pred_region
    _
  $region5: #{predator_actor_forward.1} parent=0 // pred_fallthru
    _
  // Predicated region
  $region6: #{predator_actor_forward.1} parent=0 // pred_check
    _
  $region7: #{predator_actor_forward.1} parent=0 // pred_check_branch
    %12 = sbr.rel (0) target = $region9
  $region8: #{predator_actor_forward.1} parent=0 // pred_region
    _
  $region9: #{predator_actor_forward.1} parent=0 // pred_fallthru
    _
  // Predicated region
  $region10: #{predator_actor_forward.1} parent=0 // pred_check
    _
  $region11: #{predator_actor_forward.1} parent=0 // pred_check_branch
    %14 = sbr.rel (0) target = $region13
  $region12: #{predator_actor_forward.1} parent=0 // pred_region
    _
  $region13: #{predator_actor_forward.1} parent=0 // pred_fallthru
    _
  // Predicated region
  $region14: #{predator_actor_forward.1} parent=0 // pred_check
    _
  $region15: #{predator_actor_forward.1} parent=0 // pred_check_branch
    %16 = sbr.rel (0) target = $region17
  $region16: #{predator_actor_forward.1} parent=0 // pred_region
    _
  $region17: #{predator_actor_forward.1} parent=0 // pred_fallthru
    _
  %v18 = vld [vmem:[%s0] sm:$0xff]
  %v19 = vld [vmem:[%s0 + $0x8] sm:$0xff]
  %v20 = vld [vmem:[%s1] sm:$0xff]
  %v21 = vld [vmem:[%s1 + $0x8] sm:$0xff]
  %v22 = vld [vmem:[%s3] sm:$0xff]
  %v23 = vld [vmem:[%s3 + $0x8] sm:$0xff]
  %v24 = vld [vmem:[%s3 + $0x10] sm:$0xff]
  %v25 = vld [vmem:[%s3 + $0x18] sm:$0xff]
  %v26 = vlaneseq
  %v27 = vand.u32 %v26, 127
  %vm28 = vcmp.lt.s32.totalorder %v27, 64
  %30 = vset.pattern.permute.xlu0 4
  %31 = vperm.xlu0 %30, %v20
  %v32 = vpop.permute.xlu0 %31
  %35 = vset.pattern.permute.xlu0 4
  %36 = vperm.xlu0 %35, %v21
  %v37 = vpop.permute.xlu0 %36
  %39 = vset.pattern.permute.xlu0 5
  %40 = vperm.xlu0 %39, %v20
  %v41 = vpop.permute.xlu0 %40
  %43 = vset.pattern.permute.xlu0 5
  %44 = vperm.xlu0 %43, %v21
  %v45 = vpop.permute.xlu0 %44
  %v47 = vsel %vm28, %v32, %v41
  %v48 = vsel %vm28, %v37, %v45
  %v49 = vsub.f32 %v47, 1.0
  %v50 = vsub.f32 %v48, 1.0
  %v51 = vmul.f32 %v49, 1e+30
  %v52 = vmul.f32 %v50, 1e+30
  %v53 = vadd.f32 %v47, %v48
  %v54 = vrot.slane %v53, 4
  %v55 = vadd.f32 %v53, %v54
  %v56 = vrot.slane %v55, 2
  %v57 = vadd.f32 %v55, %v56
  %v58 = vrot.slane %v57, 1
  %v59 = vadd.f32 %v57, %v58
  %v60 = vmax.f32 %v59, 1.0
  %v61 = vrcp.pop %v60
  %v62 = vpack.c.bf16 %v19, %v18
  %v63 = vld [vmem:[%s2] sm:$0xf]
  %v64 = vld [vmem:[%s2 + $0x4] sm:$0xf]
  %v65 = vld [vmem:[%s2 + $0x8] sm:$0xf]
  %v66 = vld [vmem:[%s2 + $0xc] sm:$0xf]
  %v67 = vld [vmem:[%s2 + $0x10] sm:$0xf]
  %v68 = vld [vmem:[%s2 + $0x14] sm:$0xf]
  %v69 = vld [vmem:[%s2 + $0x18] sm:$0xf]
  %v70 = vld [vmem:[%s2 + $0x1c] sm:$0xf]
  %v71 = vld [vmem:[%s2 + $0x20] sm:$0xf]
  %v72 = vld [vmem:[%s2 + $0x24] sm:$0xf]
  %v73 = vld [vmem:[%s2 + $0x28] sm:$0xf]
  %v74 = vld [vmem:[%s2 + $0x2c] sm:$0xf]
  %v75 = vld [vmem:[%s2 + $0x30] sm:$0xf]
  %v76 = vld [vmem:[%s2 + $0x34] sm:$0xf]
  %v77 = vld [vmem:[%s2 + $0x38] sm:$0xf]
  %v78 = vld [vmem:[%s2 + $0x3c] sm:$0xf]
  %v79 = vlaneseq
  %v80 = vshrl.u32 %v79, 7
  %v81 = vsub.s32 0, %v80
  %v82 = vrot.slane %v25, %v81
  %v99 = vunpack.c.l.b16 %v63
  %v100 = vunpack.c.l.b16 %v64
  %v101 = vunpack.c.l.b16 %v65
  %v102 = vunpack.c.l.b16 %v66
  %v103 = vunpack.c.l.b16 %v67
  %v104 = vunpack.c.l.b16 %v68
  %v105 = vunpack.c.l.b16 %v69
  %v106 = vunpack.c.l.b16 %v70
  %v107 = vunpack.c.l.b16 %v71
  %v108 = vunpack.c.l.b16 %v72
  %v109 = vunpack.c.l.b16 %v73
  %v110 = vunpack.c.l.b16 %v74
  %v111 = vunpack.c.l.b16 %v75
  %v112 = vunpack.c.l.b16 %v76
  %v113 = vunpack.c.l.b16 %v77
  %v114 = vunpack.c.l.b16 %v78
  %v115 = vpack.c.b16 %v100, %v99
  %v116 = vpack.c.b16 %v102, %v101
  %v117 = vpack.c.b16 %v104, %v103
  %v118 = vpack.c.b16 %v106, %v105
  %v119 = vpack.c.b16 %v108, %v107
  %v120 = vpack.c.b16 %v110, %v109
  %v121 = vpack.c.b16 %v112, %v111
  %v122 = vpack.c.b16 %v114, %v113
  %131 = vmatprep.subr.bf16.mxu0 0
  %132 = vmatpush1.bf16.msra.mxu0 %v115
  %133 = vmatprep.subr.bf16.mxu0 0
  %134 = vmatpush1.bf16.msra.mxu0 %v116
  %135 = vmatprep.subr.bf16.mxu0 0
  %136 = vmatpush1.bf16.msra.mxu0 %v117
  %137 = vmatprep.subr.bf16.mxu0 0
  %138 = vmatpush1.bf16.msra.mxu0 %v118
  %139 = vmatprep.subr.bf16.mxu0 0
  %140 = vmatpush1.bf16.msra.mxu0 %v119
  %141 = vmatprep.subr.bf16.mxu0 0
  %142 = vmatpush1.bf16.msra.mxu0 %v120
  %143 = vmatprep.subr.bf16.mxu0 0
  %144 = vmatpush1.bf16.msra.mxu0 %v121
  %145 = vmatprep.subr.bf16.mxu0 0
  %146 = vmatpush1.bf16.msra.mxu0 %v122
  %147 = vmatprep.subr.bf16.mxu0 0
  %148 = vmatpush1.bf16.msra.mxu0 0
  %149 = vmatprep.subr.bf16.mxu0 0
  %150 = vmatpush1.bf16.msra.mxu0 0
  %151 = vmatprep.subr.bf16.mxu0 0
  %152 = vmatpush1.bf16.msra.mxu0 0
  %153 = vmatprep.subr.bf16.mxu0 0
  %154 = vmatpush1.bf16.msra.mxu0 0
  %155 = vmatprep.subr.bf16.mxu0 0
  %156 = vmatpush1.bf16.msra.mxu0 0
  %157 = vmatprep.subr.bf16.mxu0 0
  %158 = vmatpush1.bf16.msra.mxu0 0
  %159 = vmatprep.subr.bf16.mxu0 0
  %160 = vmatpush1.bf16.msra.mxu0 0
  %161 = vmatprep.subr.bf16.mxu0 0
  %162 = vmatpush1.bf16.msra.mxu0 0
  %163 = vmatprep.mubr.bf16.mxu0 0
  %164 = vmatmul.mubr.bf16.gmra.mrb[0].mxu0 %v62
  %v165 = vpop.f32.mrb[0].mxu0
  %v166 = vadd.f32 %v82, %v165
  %v167 = vpop.f32.mrb[0].mxu0
  %v168 = vpop.f32.mrb[0].mxu0
  %v169 = vadd.f32 %v82, %v168
  %v170 = vpop.f32.mrb[0].mxu0
  %171 = vdwg.mxu0
  %172 = vset.pattern.permute.xlu0 0
  %173 = vperm.xlu0 %172, %v20
  %v174 = vpop.permute.xlu0 %173
  %176 = vset.pattern.permute.xlu0 0
  %177 = vperm.xlu0 %176, %v21
  %v178 = vpop.permute.xlu0 %177
  %v180 = vlaneseq
  %v181 = vshrl.u32 %v180, 7
  %v182 = vsub.s32 0, %v181
  %v183 = vrot.slane %v22, %v182
  %v184 = vmul.f32 %v174, %v183
  %v185 = vmul.f32 %v178, %v183
  %186 = vset.pattern.permute.xlu0 1
  %187 = vperm.xlu0 %186, %v20
  %v188 = vpop.permute.xlu0 %187
  %190 = vset.pattern.permute.xlu0 1
  %191 = vperm.xlu0 %190, %v21
  %v192 = vpop.permute.xlu0 %191
  %v194 = vlaneseq
  %v195 = vshrl.u32 %v194, 7
  %v196 = vsub.s32 1, %v195
  %v197 = vrot.slane %v22, %v196
  %v198 = vmul.f32 %v188, %v197
  %v199 = vmul.f32 %v192, %v197
  %v200 = vadd.f32 %v184, %v198
  %v201 = vadd.f32 %v185, %v199
  %202 = vset.pattern.permute.xlu0 2
  %203 = vperm.xlu0 %202, %v20
  %v204 = vpop.permute.xlu0 %203
  %206 = vset.pattern.permute.xlu0 2
  %207 = vperm.xlu0 %206, %v21
  %v208 = vpop.permute.xlu0 %207
  %v210 = vlaneseq
  %v211 = vshrl.u32 %v210, 7
  %v212 = vsub.s32 2, %v211
  %v213 = vrot.slane %v22, %v212
  %v214 = vmul.f32 %v204, %v213
  %v215 = vmul.f32 %v208, %v213
  %v216 = vadd.f32 %v200, %v214
  %v217 = vadd.f32 %v201, %v215
  %218 = vset.pattern.permute.xlu0 3
  %219 = vperm.xlu0 %218, %v20
  %v220 = vpop.permute.xlu0 %219
  %222 = vset.pattern.permute.xlu0 3
  %223 = vperm.xlu0 %222, %v21
  %v224 = vpop.permute.xlu0 %223
  %v226 = vlaneseq
  %v227 = vshrl.u32 %v226, 7
  %v228 = vsub.s32 3, %v227
  %v229 = vrot.slane %v22, %v228
  %v230 = vmul.f32 %v220, %v229
  %v231 = vmul.f32 %v224, %v229
  %v232 = vadd.f32 %v216, %v230
  %v233 = vadd.f32 %v217, %v231
  %v234 = vadd.f32 %v166, %v232
  %v235 = vadd.f32 %v169, %v233
  %v236 = vadd.f32 %v234, %v51
  %v237 = vadd.f32 %v235, %v52
  %v238 = vlaneseq
  %v239 = vshrl.u32 %v238, 7
  %v240 = vsub.s32 0, %v239
  %v241 = vrot.slane %v236, %v240
  %v242 = vsub.f32 %v241, %v232
  %v243 = vsub.f32 %v241, %v233
  %v244 = vmax.f32 %v242, 0.0
  %v245 = vmax.f32 %v243, 0.0
  %v246 = vlaneseq
  %v247 = vshrl.u32 %v246, 7
  %v248 = vsub.s32 1, %v247
  %v249 = vrot.slane %v236, %v248
  %v250 = vsub.f32 %v249, %v232
  %v251 = vsub.f32 %v249, %v233
  %v252 = vmax.f32 %v250, 0.0
  %v253 = vmax.f32 %v251, 0.0
  %v254 = vadd.f32 %v244, %v252
  %v255 = vadd.f32 %v245, %v253
  %v256 = vlaneseq
  %v257 = vshrl.u32 %v256, 7
  %v258 = vsub.s32 2, %v257
  %v259 = vrot.slane %v236, %v258
  %v260 = vsub.f32 %v259, %v232
  %v261 = vsub.f32 %v259, %v233
  %v262 = vmax.f32 %v260, 0.0
  %v263 = vmax.f32 %v261, 0.0
  %v264 = vadd.f32 %v254, %v262
  %v265 = vadd.f32 %v255, %v263
  %v266 = vlaneseq
  %v267 = vshrl.u32 %v266, 7
  %v268 = vsub.s32 3, %v267
  %v269 = vrot.slane %v236, %v268
  %v270 = vsub.f32 %v269, %v232
  %v271 = vsub.f32 %v269, %v233
  %v272 = vmax.f32 %v270, 0.0
  %v273 = vmax.f32 %v271, 0.0
  %v274 = vadd.f32 %v264, %v272
  %v275 = vadd.f32 %v265, %v273
  %v276 = vlaneseq
  %v277 = vshrl.u32 %v276, 7
  %v278 = vsub.s32 4, %v277
  %v279 = vrot.slane %v236, %v278
  %v280 = vsub.f32 %v279, %v232
  %v281 = vsub.f32 %v279, %v233
  %v282 = vmax.f32 %v280, 0.0
  %v283 = vmax.f32 %v281, 0.0
  %v284 = vadd.f32 %v274, %v282
  %v285 = vadd.f32 %v275, %v283
  %v286 = vlaneseq
  %v287 = vshrl.u32 %v286, 7
  %v288 = vsub.s32 5, %v287
  %v289 = vrot.slane %v236, %v288
  %v290 = vsub.f32 %v289, %v232
  %v291 = vsub.f32 %v289, %v233
  %v292 = vmax.f32 %v290, 0.0
  %v293 = vmax.f32 %v291, 0.0
  %v294 = vadd.f32 %v284, %v292
  %v295 = vadd.f32 %v285, %v293
  %v296 = vlaneseq
  %v297 = vshrl.u32 %v296, 7
  %v298 = vsub.s32 6, %v297
  %v299 = vrot.slane %v236, %v298
  %v300 = vsub.f32 %v299, %v232
  %v301 = vsub.f32 %v299, %v233
  %v302 = vmax.f32 %v300, 0.0
  %v303 = vmax.f32 %v301, 0.0
  %v304 = vadd.f32 %v294, %v302
  %v305 = vadd.f32 %v295, %v303
  %v306 = vlaneseq
  %v307 = vshrl.u32 %v306, 7
  %v308 = vsub.s32 7, %v307
  %v309 = vrot.slane %v236, %v308
  %v310 = vsub.f32 %v309, %v232
  %v311 = vsub.f32 %v309, %v233
  %v312 = vmax.f32 %v310, 0.0
  %v313 = vmax.f32 %v311, 0.0
  %v314 = vadd.f32 %v304, %v312
  %v315 = vadd.f32 %v305, %v313
  %v316 = vlaneseq
  %v317 = vshrl.u32 %v316, 7
  %v318 = vsub.s32 0, %v317
  %v319 = vrot.slane %v237, %v318
  %v320 = vsub.f32 %v319, %v232
  %v321 = vsub.f32 %v319, %v233
  %v322 = vmax.f32 %v320, 0.0
  %v323 = vmax.f32 %v321, 0.0
  %v324 = vadd.f32 %v314, %v322
  %v325 = vadd.f32 %v315, %v323
  %v326 = vlaneseq
  %v327 = vshrl.u32 %v326, 7
  %v328 = vsub.s32 1, %v327
  %v329 = vrot.slane %v237, %v328
  %v330 = vsub.f32 %v329, %v232
  %v331 = vsub.f32 %v329, %v233
  %v332 = vmax.f32 %v330, 0.0
  %v333 = vmax.f32 %v331, 0.0
  %v334 = vadd.f32 %v324, %v332
  %v335 = vadd.f32 %v325, %v333
  %v336 = vlaneseq
  %v337 = vshrl.u32 %v336, 7
  %v338 = vsub.s32 2, %v337
  %v339 = vrot.slane %v237, %v338
  %v340 = vsub.f32 %v339, %v232
  %v341 = vsub.f32 %v339, %v233
  %v342 = vmax.f32 %v340, 0.0
  %v343 = vmax.f32 %v341, 0.0
  %v344 = vadd.f32 %v334, %v342
  %v345 = vadd.f32 %v335, %v343
  %v346 = vlaneseq
  %v347 = vshrl.u32 %v346, 7
  %v348 = vsub.s32 3, %v347
  %v349 = vrot.slane %v237, %v348
  %v350 = vsub.f32 %v349, %v232
  %v351 = vsub.f32 %v349, %v233
  %v352 = vmax.f32 %v350, 0.0
  %v353 = vmax.f32 %v351, 0.0
  %v354 = vadd.f32 %v344, %v352
  %v355 = vadd.f32 %v345, %v353
  %v356 = vlaneseq
  %v357 = vshrl.u32 %v356, 7
  %v358 = vsub.s32 4, %v357
  %v359 = vrot.slane %v237, %v358
  %v360 = vsub.f32 %v359, %v232
  %v361 = vsub.f32 %v359, %v233
  %v362 = vmax.f32 %v360, 0.0
  %v363 = vmax.f32 %v361, 0.0
  %v364 = vadd.f32 %v354, %v362
  %v365 = vadd.f32 %v355, %v363
  %v366 = vlaneseq
  %v367 = vshrl.u32 %v366, 7
  %v368 = vsub.s32 5, %v367
  %v369 = vrot.slane %v237, %v368
  %v370 = vsub.f32 %v369, %v232
  %v371 = vsub.f32 %v369, %v233
  %v372 = vmax.f32 %v370, 0.0
  %v373 = vmax.f32 %v371, 0.0
  %v374 = vadd.f32 %v364, %v372
  %v375 = vadd.f32 %v365, %v373
  %v376 = vlaneseq
  %v377 = vshrl.u32 %v376, 7
  %v378 = vsub.s32 6, %v377
  %v379 = vrot.slane %v237, %v378
  %v380 = vsub.f32 %v379, %v232
  %v381 = vsub.f32 %v379, %v233
  %v382 = vmax.f32 %v380, 0.0
  %v383 = vmax.f32 %v381, 0.0
  %v384 = vadd.f32 %v374, %v382
  %v385 = vadd.f32 %v375, %v383
  %v386 = vlaneseq
  %v387 = vshrl.u32 %v386, 7
  %v388 = vsub.s32 7, %v387
  %v389 = vrot.slane %v237, %v388
  %v390 = vsub.f32 %v389, %v232
  %v391 = vsub.f32 %v389, %v233
  %v392 = vmax.f32 %v390, 0.0
  %v393 = vmax.f32 %v391, 0.0
  %v394 = vadd.f32 %v384, %v392
  %v395 = vadd.f32 %v385, %v393
  %v396 = vmul.f32 %v394, %v61
  %v397 = vmul.f32 %v395, %v61
  %v398 = vpack.c.bf16 %v397, %v396
  %s399 = scalar_lea.vmem %s2, 64
  %v400 = vld [vmem:[%s399] sm:$0xf]
  %v401 = vld [vmem:[%s399 + $0x4] sm:$0xf]
  %v402 = vld [vmem:[%s399 + $0x8] sm:$0xf]
  %v403 = vld [vmem:[%s399 + $0xc] sm:$0xf]
  %v404 = vld [vmem:[%s399 + $0x10] sm:$0xf]
  %v405 = vld [vmem:[%s399 + $0x14] sm:$0xf]
  %v406 = vld [vmem:[%s399 + $0x18] sm:$0xf]
  %v407 = vld [vmem:[%s399 + $0x1c] sm:$0xf]
  %v408 = vld [vmem:[%s399 + $0x20] sm:$0xf]
  %v409 = vld [vmem:[%s399 + $0x24] sm:$0xf]
  %v410 = vld [vmem:[%s399 + $0x28] sm:$0xf]
  %v411 = vld [vmem:[%s399 + $0x2c] sm:$0xf]
  %v412 = vld [vmem:[%s399 + $0x30] sm:$0xf]
  %v413 = vld [vmem:[%s399 + $0x34] sm:$0xf]
  %v414 = vld [vmem:[%s399 + $0x38] sm:$0xf]
  %v415 = vld [vmem:[%s399 + $0x3c] sm:$0xf]
  %v416 = vlaneseq
  %v417 = vshrl.u32 %v416, 7
  %v418 = vsub.s32 1, %v417
  %v419 = vrot.slane %v25, %v418
  %v436 = vunpack.c.l.b16 %v400
  %v437 = vunpack.c.l.b16 %v401
  %v438 = vunpack.c.l.b16 %v402
  %v439 = vunpack.c.l.b16 %v403
  %v440 = vunpack.c.l.b16 %v404
  %v441 = vunpack.c.l.b16 %v405
  %v442 = vunpack.c.l.b16 %v406
  %v443 = vunpack.c.l.b16 %v407
  %v444 = vunpack.c.l.b16 %v408
  %v445 = vunpack.c.l.b16 %v409
  %v446 = vunpack.c.l.b16 %v410
  %v447 = vunpack.c.l.b16 %v411
  %v448 = vunpack.c.l.b16 %v412
  %v449 = vunpack.c.l.b16 %v413
  %v450 = vunpack.c.l.b16 %v414
  %v451 = vunpack.c.l.b16 %v415
  %v452 = vpack.c.b16 %v437, %v436
  %v453 = vpack.c.b16 %v439, %v438
  %v454 = vpack.c.b16 %v441, %v440
  %v455 = vpack.c.b16 %v443, %v442
  %v456 = vpack.c.b16 %v445, %v444
  %v457 = vpack.c.b16 %v447, %v446
  %v458 = vpack.c.b16 %v449, %v448
  %v459 = vpack.c.b16 %v451, %v450
  %468 = vmatprep.subr.bf16.mxu0 0
  %469 = vmatpush1.bf16.msra.mxu0 %v452
  %470 = vmatprep.subr.bf16.mxu0 0
  %471 = vmatpush1.bf16.msra.mxu0 %v453
  %472 = vmatprep.subr.bf16.mxu0 0
  %473 = vmatpush1.bf16.msra.mxu0 %v454
  %474 = vmatprep.subr.bf16.mxu0 0
  %475 = vmatpush1.bf16.msra.mxu0 %v455
  %476 = vmatprep.subr.bf16.mxu0 0
  %477 = vmatpush1.bf16.msra.mxu0 %v456
  %478 = vmatprep.subr.bf16.mxu0 0
  %479 = vmatpush1.bf16.msra.mxu0 %v457
  %480 = vmatprep.subr.bf16.mxu0 0
  %481 = vmatpush1.bf16.msra.mxu0 %v458
  %482 = vmatprep.subr.bf16.mxu0 0
  %483 = vmatpush1.bf16.msra.mxu0 %v459
  %484 = vmatprep.subr.bf16.mxu0 0
  %485 = vmatpush1.bf16.msra.mxu0 0
  %486 = vmatprep.subr.bf16.mxu0 0
  %487 = vmatpush1.bf16.msra.mxu0 0
  %488 = vmatprep.subr.bf16.mxu0 0
  %489 = vmatpush1.bf16.msra.mxu0 0
  %490 = vmatprep.subr.bf16.mxu0 0
  %491 = vmatpush1.bf16.msra.mxu0 0
  %492 = vmatprep.subr.bf16.mxu0 0
  %493 = vmatpush1.bf16.msra.mxu0 0
  %494 = vmatprep.subr.bf16.mxu0 0
  %495 = vmatpush1.bf16.msra.mxu0 0
  %496 = vmatprep.subr.bf16.mxu0 0
  %497 = vmatpush1.bf16.msra.mxu0 0
  %498 = vmatprep.subr.bf16.mxu0 0
  %499 = vmatpush1.bf16.msra.mxu0 0
  %500 = vmatprep.mubr.bf16.mxu0 0
  %501 = vmatmul.mubr.bf16.gmra.mrb[0].mxu0 %v398
  %v502 = vpop.f32.mrb[0].mxu0
  %v503 = vadd.f32 %v419, %v502
  %v504 = vpop.f32.mrb[0].mxu0
  %v505 = vpop.f32.mrb[0].mxu0
  %v506 = vadd.f32 %v419, %v505
  %v507 = vpop.f32.mrb[0].mxu0
  %508 = vdwg.mxu0
  %v509 = vadd.f32 %v503, %v18
  %v510 = vadd.f32 %v506, %v19
  %v511 = vmax.f32 %v509, 0.0
  %v512 = vmax.f32 %v510, 0.0
  %v513 = vmul.f32 %v511, %v47
  %v514 = vmul.f32 %v512, %v48
  %v515 = vpack.c.bf16 %v514, %v513
  %s516 = scalar_lea.vmem %s2, 128
  %v517 = vld [vmem:[%s516] sm:$0xf]
  %v518 = vld [vmem:[%s516 + $0x4] sm:$0xf]
  %v519 = vld [vmem:[%s516 + $0x8] sm:$0xf]
  %v520 = vld [vmem:[%s516 + $0xc] sm:$0xf]
  %v521 = vld [vmem:[%s516 + $0x10] sm:$0xf]
  %v522 = vld [vmem:[%s516 + $0x14] sm:$0xf]
  %v523 = vld [vmem:[%s516 + $0x18] sm:$0xf]
  %v524 = vld [vmem:[%s516 + $0x1c] sm:$0xf]
  %v525 = vld [vmem:[%s516 + $0x20] sm:$0xf]
  %v526 = vld [vmem:[%s516 + $0x24] sm:$0xf]
  %v527 = vld [vmem:[%s516 + $0x28] sm:$0xf]
  %v528 = vld [vmem:[%s516 + $0x2c] sm:$0xf]
  %v529 = vld [vmem:[%s516 + $0x30] sm:$0xf]
  %v530 = vld [vmem:[%s516 + $0x34] sm:$0xf]
  %v531 = vld [vmem:[%s516 + $0x38] sm:$0xf]
  %v532 = vld [vmem:[%s516 + $0x3c] sm:$0xf]
  %v533 = vlaneseq
  %v534 = vshrl.u32 %v533, 7
  %v535 = vsub.s32 2, %v534
  %v536 = vrot.slane %v25, %v535
  %v553 = vunpack.c.l.b16 %v517
  %v554 = vunpack.c.l.b16 %v518
  %v555 = vunpack.c.l.b16 %v519
  %v556 = vunpack.c.l.b16 %v520
  %v557 = vunpack.c.l.b16 %v521
  %v558 = vunpack.c.l.b16 %v522
  %v559 = vunpack.c.l.b16 %v523
  %v560 = vunpack.c.l.b16 %v524
  %v561 = vunpack.c.l.b16 %v525
  %v562 = vunpack.c.l.b16 %v526
  %v563 = vunpack.c.l.b16 %v527
  %v564 = vunpack.c.l.b16 %v528
  %v565 = vunpack.c.l.b16 %v529
  %v566 = vunpack.c.l.b16 %v530
  %v567 = vunpack.c.l.b16 %v531
  %v568 = vunpack.c.l.b16 %v532
  %v569 = vpack.c.b16 %v554, %v553
  %v570 = vpack.c.b16 %v556, %v555
  %v571 = vpack.c.b16 %v558, %v557
  %v572 = vpack.c.b16 %v560, %v559
  %v573 = vpack.c.b16 %v562, %v561
  %v574 = vpack.c.b16 %v564, %v563
  %v575 = vpack.c.b16 %v566, %v565
  %v576 = vpack.c.b16 %v568, %v567
  %585 = vmatprep.subr.bf16.mxu0 0
  %586 = vmatpush1.bf16.msra.mxu0 %v569
  %587 = vmatprep.subr.bf16.mxu0 0
  %588 = vmatpush1.bf16.msra.mxu0 %v570
  %589 = vmatprep.subr.bf16.mxu0 0
  %590 = vmatpush1.bf16.msra.mxu0 %v571
  %591 = vmatprep.subr.bf16.mxu0 0
  %592 = vmatpush1.bf16.msra.mxu0 %v572
  %593 = vmatprep.subr.bf16.mxu0 0
  %594 = vmatpush1.bf16.msra.mxu0 %v573
  %595 = vmatprep.subr.bf16.mxu0 0
  %596 = vmatpush1.bf16.msra.mxu0 %v574
  %597 = vmatprep.subr.bf16.mxu0 0
  %598 = vmatpush1.bf16.msra.mxu0 %v575
  %599 = vmatprep.subr.bf16.mxu0 0
  %600 = vmatpush1.bf16.msra.mxu0 %v576
  %601 = vmatprep.subr.bf16.mxu0 0
  %602 = vmatpush1.bf16.msra.mxu0 0
  %603 = vmatprep.subr.bf16.mxu0 0
  %604 = vmatpush1.bf16.msra.mxu0 0
  %605 = vmatprep.subr.bf16.mxu0 0
  %606 = vmatpush1.bf16.msra.mxu0 0
  %607 = vmatprep.subr.bf16.mxu0 0
  %608 = vmatpush1.bf16.msra.mxu0 0
  %609 = vmatprep.subr.bf16.mxu0 0
  %610 = vmatpush1.bf16.msra.mxu0 0
  %611 = vmatprep.subr.bf16.mxu0 0
  %612 = vmatpush1.bf16.msra.mxu0 0
  %613 = vmatprep.subr.bf16.mxu0 0
  %614 = vmatpush1.bf16.msra.mxu0 0
  %615 = vmatprep.subr.bf16.mxu0 0
  %616 = vmatpush1.bf16.msra.mxu0 0
  %617 = vmatprep.mubr.bf16.mxu0 0
  %618 = vmatmul.mubr.bf16.gmra.mrb[0].mxu0 %v515
  %v619 = vpop.f32.mrb[0].mxu0
  %v620 = vadd.f32 %v536, %v619
  %v621 = vpop.f32.mrb[0].mxu0
  %v622 = vpop.f32.mrb[0].mxu0
  %v623 = vadd.f32 %v536, %v622
  %v624 = vpop.f32.mrb[0].mxu0
  %625 = vdwg.mxu0
  %v626 = vlaneseq
  %v627 = vshrl.u32 %v626, 7
  %v628 = vsub.s32 0, %v627
  %v629 = vrot.slane %v23, %v628
  %v630 = vmul.f32 %v174, %v629
  %v631 = vmul.f32 %v178, %v629
  %v632 = vlaneseq
  %v633 = vshrl.u32 %v632, 7
  %v634 = vsub.s32 1, %v633
  %v635 = vrot.slane %v23, %v634
  %v636 = vmul.f32 %v188, %v635
  %v637 = vmul.f32 %v192, %v635
  %v638 = vadd.f32 %v630, %v636
  %v639 = vadd.f32 %v631, %v637
  %v640 = vlaneseq
  %v641 = vshrl.u32 %v640, 7
  %v642 = vsub.s32 2, %v641
  %v643 = vrot.slane %v23, %v642
  %v644 = vmul.f32 %v204, %v643
  %v645 = vmul.f32 %v208, %v643
  %v646 = vadd.f32 %v638, %v644
  %v647 = vadd.f32 %v639, %v645
  %v648 = vlaneseq
  %v649 = vshrl.u32 %v648, 7
  %v650 = vsub.s32 3, %v649
  %v651 = vrot.slane %v23, %v650
  %v652 = vmul.f32 %v220, %v651
  %v653 = vmul.f32 %v224, %v651
  %v654 = vadd.f32 %v646, %v652
  %v655 = vadd.f32 %v647, %v653
  %v656 = vadd.f32 %v620, %v654
  %v657 = vadd.f32 %v623, %v655
  %v658 = vadd.f32 %v656, %v51
  %v659 = vadd.f32 %v657, %v52
  %v660 = vlaneseq
  %v661 = vshrl.u32 %v660, 7
  %v662 = vsub.s32 0, %v661
  %v663 = vrot.slane %v658, %v662
  %v664 = vsub.f32 %v663, %v654
  %v665 = vsub.f32 %v663, %v655
  %v666 = vmax.f32 %v664, 0.0
  %v667 = vmax.f32 %v665, 0.0
  %v668 = vlaneseq
  %v669 = vshrl.u32 %v668, 7
  %v670 = vsub.s32 1, %v669
  %v671 = vrot.slane %v658, %v670
  %v672 = vsub.f32 %v671, %v654
  %v673 = vsub.f32 %v671, %v655
  %v674 = vmax.f32 %v672, 0.0
  %v675 = vmax.f32 %v673, 0.0
  %v676 = vadd.f32 %v666, %v674
  %v677 = vadd.f32 %v667, %v675
  %v678 = vlaneseq
  %v679 = vshrl.u32 %v678, 7
  %v680 = vsub.s32 2, %v679
  %v681 = vrot.slane %v658, %v680
  %v682 = vsub.f32 %v681, %v654
  %v683 = vsub.f32 %v681, %v655
  %v684 = vmax.f32 %v682, 0.0
  %v685 = vmax.f32 %v683, 0.0
  %v686 = vadd.f32 %v676, %v684
  %v687 = vadd.f32 %v677, %v685
  %v688 = vlaneseq
  %v689 = vshrl.u32 %v688, 7
  %v690 = vsub.s32 3, %v689
  %v691 = vrot.slane %v658, %v690
  %v692 = vsub.f32 %v691, %v654
  %v693 = vsub.f32 %v691, %v655
  %v694 = vmax.f32 %v692, 0.0
  %v695 = vmax.f32 %v693, 0.0
  %v696 = vadd.f32 %v686, %v694
  %v697 = vadd.f32 %v687, %v695
  %v698 = vlaneseq
  %v699 = vshrl.u32 %v698, 7
  %v700 = vsub.s32 4, %v699
  %v701 = vrot.slane %v658, %v700
  %v702 = vsub.f32 %v701, %v654
  %v703 = vsub.f32 %v701, %v655
  %v704 = vmax.f32 %v702, 0.0
  %v705 = vmax.f32 %v703, 0.0
  %v706 = vadd.f32 %v696, %v704
  %v707 = vadd.f32 %v697, %v705
  %v708 = vlaneseq
  %v709 = vshrl.u32 %v708, 7
  %v710 = vsub.s32 5, %v709
  %v711 = vrot.slane %v658, %v710
  %v712 = vsub.f32 %v711, %v654
  %v713 = vsub.f32 %v711, %v655
  %v714 = vmax.f32 %v712, 0.0
  %v715 = vmax.f32 %v713, 0.0
  %v716 = vadd.f32 %v706, %v714
  %v717 = vadd.f32 %v707, %v715
  %v718 = vlaneseq
  %v719 = vshrl.u32 %v718, 7
  %v720 = vsub.s32 6, %v719
  %v721 = vrot.slane %v658, %v720
  %v722 = vsub.f32 %v721, %v654
  %v723 = vsub.f32 %v721, %v655
  %v724 = vmax.f32 %v722, 0.0
  %v725 = vmax.f32 %v723, 0.0
  %v726 = vadd.f32 %v716, %v724
  %v727 = vadd.f32 %v717, %v725
  %v728 = vlaneseq
  %v729 = vshrl.u32 %v728, 7
  %v730 = vsub.s32 7, %v729
  %v731 = vrot.slane %v658, %v730
  %v732 = vsub.f32 %v731, %v654
  %v733 = vsub.f32 %v731, %v655
  %v734 = vmax.f32 %v732, 0.0
  %v735 = vmax.f32 %v733, 0.0
  %v736 = vadd.f32 %v726, %v734
  %v737 = vadd.f32 %v727, %v735
  %v738 = vlaneseq
  %v739 = vshrl.u32 %v738, 7
  %v740 = vsub.s32 0, %v739
  %v741 = vrot.slane %v659, %v740
  %v742 = vsub.f32 %v741, %v654
  %v743 = vsub.f32 %v741, %v655
  %v744 = vmax.f32 %v742, 0.0
  %v745 = vmax.f32 %v743, 0.0
  %v746 = vadd.f32 %v736, %v744
  %v747 = vadd.f32 %v737, %v745
  %v748 = vlaneseq
  %v749 = vshrl.u32 %v748, 7
  %v750 = vsub.s32 1, %v749
  %v751 = vrot.slane %v659, %v750
  %v752 = vsub.f32 %v751, %v654
  %v753 = vsub.f32 %v751, %v655
  %v754 = vmax.f32 %v752, 0.0
  %v755 = vmax.f32 %v753, 0.0
  %v756 = vadd.f32 %v746, %v754
  %v757 = vadd.f32 %v747, %v755
  %v758 = vlaneseq
  %v759 = vshrl.u32 %v758, 7
  %v760 = vsub.s32 2, %v759
  %v761 = vrot.slane %v659, %v760
  %v762 = vsub.f32 %v761, %v654
  %v763 = vsub.f32 %v761, %v655
  %v764 = vmax.f32 %v762, 0.0
  %v765 = vmax.f32 %v763, 0.0
  %v766 = vadd.f32 %v756, %v764
  %v767 = vadd.f32 %v757, %v765
  %v768 = vlaneseq
  %v769 = vshrl.u32 %v768, 7
  %v770 = vsub.s32 3, %v769
  %v771 = vrot.slane %v659, %v770
  %v772 = vsub.f32 %v771, %v654
  %v773 = vsub.f32 %v771, %v655
  %v774 = vmax.f32 %v772, 0.0
  %v775 = vmax.f32 %v773, 0.0
  %v776 = vadd.f32 %v766, %v774
  %v777 = vadd.f32 %v767, %v775
  %v778 = vlaneseq
  %v779 = vshrl.u32 %v778, 7
  %v780 = vsub.s32 4, %v779
  %v781 = vrot.slane %v659, %v780
  %v782 = vsub.f32 %v781, %v654
  %v783 = vsub.f32 %v781, %v655
  %v784 = vmax.f32 %v782, 0.0
  %v785 = vmax.f32 %v783, 0.0
  %v786 = vadd.f32 %v776, %v784
  %v787 = vadd.f32 %v777, %v785
  %v788 = vlaneseq
  %v789 = vshrl.u32 %v788, 7
  %v790 = vsub.s32 5, %v789
  %v791 = vrot.slane %v659, %v790
  %v792 = vsub.f32 %v791, %v654
  %v793 = vsub.f32 %v791, %v655
  %v794 = vmax.f32 %v792, 0.0
  %v795 = vmax.f32 %v793, 0.0
  %v796 = vadd.f32 %v786, %v794
  %v797 = vadd.f32 %v787, %v795
  %v798 = vlaneseq
  %v799 = vshrl.u32 %v798, 7
  %v800 = vsub.s32 6, %v799
  %v801 = vrot.slane %v659, %v800
  %v802 = vsub.f32 %v801, %v654
  %v803 = vsub.f32 %v801, %v655
  %v804 = vmax.f32 %v802, 0.0
  %v805 = vmax.f32 %v803, 0.0
  %v806 = vadd.f32 %v796, %v804
  %v807 = vadd.f32 %v797, %v805
  %v808 = vlaneseq
  %v809 = vshrl.u32 %v808, 7
  %v810 = vsub.s32 7, %v809
  %v811 = vrot.slane %v659, %v810
  %v812 = vsub.f32 %v811, %v654
  %v813 = vsub.f32 %v811, %v655
  %v814 = vmax.f32 %v812, 0.0
  %v815 = vmax.f32 %v813, 0.0
  %v816 = vadd.f32 %v806, %v814
  %v817 = vadd.f32 %v807, %v815
  %v818 = vmul.f32 %v816, %v61
  %v819 = vmul.f32 %v817, %v61
  %v820 = vpack.c.bf16 %v819, %v818
  %s821 = scalar_lea.vmem %s2, 192
  %v822 = vld [vmem:[%s821] sm:$0xf]
  %v823 = vld [vmem:[%s821 + $0x4] sm:$0xf]
  %v824 = vld [vmem:[%s821 + $0x8] sm:$0xf]
  %v825 = vld [vmem:[%s821 + $0xc] sm:$0xf]
  %v826 = vld [vmem:[%s821 + $0x10] sm:$0xf]
  %v827 = vld [vmem:[%s821 + $0x14] sm:$0xf]
  %v828 = vld [vmem:[%s821 + $0x18] sm:$0xf]
  %v829 = vld [vmem:[%s821 + $0x1c] sm:$0xf]
  %v830 = vld [vmem:[%s821 + $0x20] sm:$0xf]
  %v831 = vld [vmem:[%s821 + $0x24] sm:$0xf]
  %v832 = vld [vmem:[%s821 + $0x28] sm:$0xf]
  %v833 = vld [vmem:[%s821 + $0x2c] sm:$0xf]
  %v834 = vld [vmem:[%s821 + $0x30] sm:$0xf]
  %v835 = vld [vmem:[%s821 + $0x34] sm:$0xf]
  %v836 = vld [vmem:[%s821 + $0x38] sm:$0xf]
  %v837 = vld [vmem:[%s821 + $0x3c] sm:$0xf]
  %v838 = vlaneseq
  %v839 = vshrl.u32 %v838, 7
  %v840 = vsub.s32 3, %v839
  %v841 = vrot.slane %v25, %v840
  %v858 = vunpack.c.l.b16 %v822
  %v859 = vunpack.c.l.b16 %v823
  %v860 = vunpack.c.l.b16 %v824
  %v861 = vunpack.c.l.b16 %v825
  %v862 = vunpack.c.l.b16 %v826
  %v863 = vunpack.c.l.b16 %v827
  %v864 = vunpack.c.l.b16 %v828
  %v865 = vunpack.c.l.b16 %v829
  %v866 = vunpack.c.l.b16 %v830
  %v867 = vunpack.c.l.b16 %v831
  %v868 = vunpack.c.l.b16 %v832
  %v869 = vunpack.c.l.b16 %v833
  %v870 = vunpack.c.l.b16 %v834
  %v871 = vunpack.c.l.b16 %v835
  %v872 = vunpack.c.l.b16 %v836
  %v873 = vunpack.c.l.b16 %v837
  %v874 = vpack.c.b16 %v859, %v858
  %v875 = vpack.c.b16 %v861, %v860
  %v876 = vpack.c.b16 %v863, %v862
  %v877 = vpack.c.b16 %v865, %v864
  %v878 = vpack.c.b16 %v867, %v866
  %v879 = vpack.c.b16 %v869, %v868
  %v880 = vpack.c.b16 %v871, %v870
  %v881 = vpack.c.b16 %v873, %v872
  %890 = vmatprep.subr.bf16.mxu0 0
  %891 = vmatpush1.bf16.msra.mxu0 %v874
  %892 = vmatprep.subr.bf16.mxu0 0
  %893 = vmatpush1.bf16.msra.mxu0 %v875
  %894 = vmatprep.subr.bf16.mxu0 0
  %895 = vmatpush1.bf16.msra.mxu0 %v876
  %896 = vmatprep.subr.bf16.mxu0 0
  %897 = vmatpush1.bf16.msra.mxu0 %v877
  %898 = vmatprep.subr.bf16.mxu0 0
  %899 = vmatpush1.bf16.msra.mxu0 %v878
  %900 = vmatprep.subr.bf16.mxu0 0
  %901 = vmatpush1.bf16.msra.mxu0 %v879
  %902 = vmatprep.subr.bf16.mxu0 0
  %903 = vmatpush1.bf16.msra.mxu0 %v880
  %904 = vmatprep.subr.bf16.mxu0 0
  %905 = vmatpush1.bf16.msra.mxu0 %v881
  %906 = vmatprep.subr.bf16.mxu0 0
  %907 = vmatpush1.bf16.msra.mxu0 0
  %908 = vmatprep.subr.bf16.mxu0 0
  %909 = vmatpush1.bf16.msra.mxu0 0
  %910 = vmatprep.subr.bf16.mxu0 0
  %911 = vmatpush1.bf16.msra.mxu0 0
  %912 = vmatprep.subr.bf16.mxu0 0
  %913 = vmatpush1.bf16.msra.mxu0 0
  %914 = vmatprep.subr.bf16.mxu0 0
  %915 = vmatpush1.bf16.msra.mxu0 0
  %916 = vmatprep.subr.bf16.mxu0 0
  %917 = vmatpush1.bf16.msra.mxu0 0
  %918 = vmatprep.subr.bf16.mxu0 0
  %919 = vmatpush1.bf16.msra.mxu0 0
  %920 = vmatprep.subr.bf16.mxu0 0
  %921 = vmatpush1.bf16.msra.mxu0 0
  %922 = vmatprep.mubr.bf16.mxu0 0
  %923 = vmatmul.mubr.bf16.gmra.mrb[0].mxu0 %v820
  %v924 = vpop.f32.mrb[0].mxu0
  %v925 = vadd.f32 %v841, %v924
  %v926 = vpop.f32.mrb[0].mxu0
  %v927 = vpop.f32.mrb[0].mxu0
  %v928 = vpop.f32.mrb[0].mxu0
  %929 = vdwg.mxu0
  %v930 = vadd.f32 %v925, %v513
  %v931 = vmax.f32 %v930, 0.0
  %v932 = vlaneseq
  %v933 = vshrl.u32 %v932, 7
  %v934 = vsub.s32 0, %v933
  %v935 = vrot.slane %v24, %v934
  %v936 = vmul.f32 %v174, %v935
  %v937 = vlaneseq
  %v938 = vshrl.u32 %v937, 7
  %v939 = vsub.s32 1, %v938
  %v940 = vrot.slane %v24, %v939
  %v941 = vmul.f32 %v188, %v940
  %v942 = vadd.f32 %v936, %v941
  %v943 = vlaneseq
  %v944 = vshrl.u32 %v943, 7
  %v945 = vsub.s32 2, %v944
  %v946 = vrot.slane %v24, %v945
  %v947 = vmul.f32 %v204, %v946
  %v948 = vadd.f32 %v942, %v947
  %v949 = vlaneseq
  %v950 = vshrl.u32 %v949, 7
  %v951 = vsub.s32 3, %v950
  %v952 = vrot.slane %v24, %v951
  %v953 = vmul.f32 %v220, %v952
  %v954 = vadd.f32 %v948, %v953
  %v955 = vadd.f32 %v931, %v954
  %v956 = vlaneseq
  %v957 = vshrl.u32 %v956, 7
  %v958 = vsub.s32 4, %v957
  %v959 = vrot.slane %v25, %v958
  %v960 = vadd.f32 %v955, %v959
  %v961 = vpack.c.bf16 %v960, %v960
  %s962 = scalar_lea.vmem %s2, 256
  %v963 = vld [vmem:[%s962] sm:$0xf]
  %v964 = vld [vmem:[%s962 + $0x4] sm:$0xf]
  %v965 = vld [vmem:[%s962 + $0x8] sm:$0xf]
  %v966 = vld [vmem:[%s962 + $0xc] sm:$0xf]
  %v967 = vld [vmem:[%s962 + $0x10] sm:$0xf]
  %v968 = vld [vmem:[%s962 + $0x14] sm:$0xf]
  %v969 = vld [vmem:[%s962 + $0x18] sm:$0xf]
  %v970 = vld [vmem:[%s962 + $0x1c] sm:$0xf]
  %v971 = vld [vmem:[%s962 + $0x20] sm:$0xf]
  %v972 = vld [vmem:[%s962 + $0x24] sm:$0xf]
  %v973 = vld [vmem:[%s962 + $0x28] sm:$0xf]
  %v974 = vld [vmem:[%s962 + $0x2c] sm:$0xf]
  %v975 = vld [vmem:[%s962 + $0x30] sm:$0xf]
  %v976 = vld [vmem:[%s962 + $0x34] sm:$0xf]
  %v977 = vld [vmem:[%s962 + $0x38] sm:$0xf]
  %v978 = vld [vmem:[%s962 + $0x3c] sm:$0xf]
  %v979 = vlaneseq
  %v980 = vshrl.u32 %v979, 7
  %v981 = vsub.s32 5, %v980
  %v982 = vrot.slane %v25, %v981
  %v999 = vunpack.c.l.b16 %v963
  %v1000 = vunpack.c.l.b16 %v964
  %v1001 = vunpack.c.l.b16 %v965
  %v1002 = vunpack.c.l.b16 %v966
  %v1003 = vunpack.c.l.b16 %v967
  %v1004 = vunpack.c.l.b16 %v968
  %v1005 = vunpack.c.l.b16 %v969
  %v1006 = vunpack.c.l.b16 %v970
  %v1007 = vunpack.c.l.b16 %v971
  %v1008 = vunpack.c.l.b16 %v972
  %v1009 = vunpack.c.l.b16 %v973
  %v1010 = vunpack.c.l.b16 %v974
  %v1011 = vunpack.c.l.b16 %v975
  %v1012 = vunpack.c.l.b16 %v976
  %v1013 = vunpack.c.l.b16 %v977
  %v1014 = vunpack.c.l.b16 %v978
  %v1015 = vpack.c.b16 %v1000, %v999
  %v1016 = vpack.c.b16 %v1002, %v1001
  %v1017 = vpack.c.b16 %v1004, %v1003
  %v1018 = vpack.c.b16 %v1006, %v1005
  %v1019 = vpack.c.b16 %v1008, %v1007
  %v1020 = vpack.c.b16 %v1010, %v1009
  %v1021 = vpack.c.b16 %v1012, %v1011
  %v1022 = vpack.c.b16 %v1014, %v1013
  %1031 = vmatprep.subr.bf16.mxu0 0
  %1032 = vmatpush1.bf16.msra.mxu0 %v1015
  %1033 = vmatprep.subr.bf16.mxu0 0
  %1034 = vmatpush1.bf16.msra.mxu0 %v1016
  %1035 = vmatprep.subr.bf16.mxu0 0
  %1036 = vmatpush1.bf16.msra.mxu0 %v1017
  %1037 = vmatprep.subr.bf16.mxu0 0
  %1038 = vmatpush1.bf16.msra.mxu0 %v1018
  %1039 = vmatprep.subr.bf16.mxu0 0
  %1040 = vmatpush1.bf16.msra.mxu0 %v1019
  %1041 = vmatprep.subr.bf16.mxu0 0
  %1042 = vmatpush1.bf16.msra.mxu0 %v1020
  %1043 = vmatprep.subr.bf16.mxu0 0
  %1044 = vmatpush1.bf16.msra.mxu0 %v1021
  %1045 = vmatprep.subr.bf16.mxu0 0
  %1046 = vmatpush1.bf16.msra.mxu0 %v1022
  %1047 = vmatprep.subr.bf16.mxu0 0
  %1048 = vmatpush1.bf16.msra.mxu0 0
  %1049 = vmatprep.subr.bf16.mxu0 0
  %1050 = vmatpush1.bf16.msra.mxu0 0
  %1051 = vmatprep.subr.bf16.mxu0 0
  %1052 = vmatpush1.bf16.msra.mxu0 0
  %1053 = vmatprep.subr.bf16.mxu0 0
  %1054 = vmatpush1.bf16.msra.mxu0 0
  %1055 = vmatprep.subr.bf16.mxu0 0
  %1056 = vmatpush1.bf16.msra.mxu0 0
  %1057 = vmatprep.subr.bf16.mxu0 0
  %1058 = vmatpush1.bf16.msra.mxu0 0
  %1059 = vmatprep.subr.bf16.mxu0 0
  %1060 = vmatpush1.bf16.msra.mxu0 0
  %1061 = vmatprep.subr.bf16.mxu0 0
  %1062 = vmatpush1.bf16.msra.mxu0 0
  %1063 = vmatprep.mubr.bf16.mxu0 0
  %1064 = vmatmul.mubr.bf16.gmra.mrb[0].mxu0 %v961
  %v1065 = vpop.f32.mrb[0].mxu0
  %v1066 = vadd.f32 %v982, %v1065
  %v1067 = vpop.f32.mrb[0].mxu0
  %v1068 = vpop.f32.mrb[0].mxu0
  %v1069 = vpop.f32.mrb[0].mxu0
  %1070 = vdwg.mxu0
  %v1071 = vmax.f32 %v1066, 0.0
  %v1072 = vpack.c.bf16 %v1071, %v1071
  %s1073 = scalar_lea.vmem %s2, 320
  %v1074 = vld [vmem:[%s1073] sm:$0xf]
  %v1075 = vld [vmem:[%s1073 + $0x4] sm:$0xf]
  %v1076 = vld [vmem:[%s1073 + $0x8] sm:$0xf]
  %v1077 = vld [vmem:[%s1073 + $0xc] sm:$0xf]
  %v1078 = vld [vmem:[%s1073 + $0x10] sm:$0xf]
  %v1079 = vld [vmem:[%s1073 + $0x14] sm:$0xf]
  %v1080 = vld [vmem:[%s1073 + $0x18] sm:$0xf]
  %v1081 = vld [vmem:[%s1073 + $0x1c] sm:$0xf]
  %v1082 = vld [vmem:[%s1073 + $0x20] sm:$0xf]
  %v1083 = vld [vmem:[%s1073 + $0x24] sm:$0xf]
  %v1084 = vld [vmem:[%s1073 + $0x28] sm:$0xf]
  %v1085 = vld [vmem:[%s1073 + $0x2c] sm:$0xf]
  %v1086 = vld [vmem:[%s1073 + $0x30] sm:$0xf]
  %v1087 = vld [vmem:[%s1073 + $0x34] sm:$0xf]
  %v1088 = vld [vmem:[%s1073 + $0x38] sm:$0xf]
  %v1089 = vld [vmem:[%s1073 + $0x3c] sm:$0xf]
  %v1090 = vlaneseq
  %v1091 = vshrl.u32 %v1090, 7
  %v1092 = vsub.s32 6, %v1091
  %v1093 = vrot.slane %v25, %v1092
  %v1110 = vunpack.c.l.b16 %v1074
  %v1111 = vunpack.c.l.b16 %v1075
  %v1112 = vunpack.c.l.b16 %v1076
  %v1113 = vunpack.c.l.b16 %v1077
  %v1114 = vunpack.c.l.b16 %v1078
  %v1115 = vunpack.c.l.b16 %v1079
  %v1116 = vunpack.c.l.b16 %v1080
  %v1117 = vunpack.c.l.b16 %v1081
  %v1118 = vunpack.c.l.b16 %v1082
  %v1119 = vunpack.c.l.b16 %v1083
  %v1120 = vunpack.c.l.b16 %v1084
  %v1121 = vunpack.c.l.b16 %v1085
  %v1122 = vunpack.c.l.b16 %v1086
  %v1123 = vunpack.c.l.b16 %v1087
  %v1124 = vunpack.c.l.b16 %v1088
  %v1125 = vunpack.c.l.b16 %v1089
  %v1126 = vpack.c.b16 %v1111, %v1110
  %v1127 = vpack.c.b16 %v1113, %v1112
  %v1128 = vpack.c.b16 %v1115, %v1114
  %v1129 = vpack.c.b16 %v1117, %v1116
  %v1130 = vpack.c.b16 %v1119, %v1118
  %v1131 = vpack.c.b16 %v1121, %v1120
  %v1132 = vpack.c.b16 %v1123, %v1122
  %v1133 = vpack.c.b16 %v1125, %v1124
  %1142 = vmatprep.subr.bf16.mxu0 0
  %1143 = vmatpush1.bf16.msra.mxu0 %v1126
  %1144 = vmatprep.subr.bf16.mxu0 0
  %1145 = vmatpush1.bf16.msra.mxu0 %v1127
  %1146 = vmatprep.subr.bf16.mxu0 0
  %1147 = vmatpush1.bf16.msra.mxu0 %v1128
  %1148 = vmatprep.subr.bf16.mxu0 0
  %1149 = vmatpush1.bf16.msra.mxu0 %v1129
  %1150 = vmatprep.subr.bf16.mxu0 0
  %1151 = vmatpush1.bf16.msra.mxu0 %v1130
  %1152 = vmatprep.subr.bf16.mxu0 0
  %1153 = vmatpush1.bf16.msra.mxu0 %v1131
  %1154 = vmatprep.subr.bf16.mxu0 0
  %1155 = vmatpush1.bf16.msra.mxu0 %v1132
  %1156 = vmatprep.subr.bf16.mxu0 0
  %1157 = vmatpush1.bf16.msra.mxu0 %v1133
  %1158 = vmatprep.subr.bf16.mxu0 0
  %1159 = vmatpush1.bf16.msra.mxu0 0
  %1160 = vmatprep.subr.bf16.mxu0 0
  %1161 = vmatpush1.bf16.msra.mxu0 0
  %1162 = vmatprep.subr.bf16.mxu0 0
  %1163 = vmatpush1.bf16.msra.mxu0 0
  %1164 = vmatprep.subr.bf16.mxu0 0
  %1165 = vmatpush1.bf16.msra.mxu0 0
  %1166 = vmatprep.subr.bf16.mxu0 0
  %1167 = vmatpush1.bf16.msra.mxu0 0
  %1168 = vmatprep.subr.bf16.mxu0 0
  %1169 = vmatpush1.bf16.msra.mxu0 0
  %1170 = vmatprep.subr.bf16.mxu0 0
  %1171 = vmatpush1.bf16.msra.mxu0 0
  %1172 = vmatprep.subr.bf16.mxu0 0
  %1173 = vmatpush1.bf16.msra.mxu0 0
  %1174 = vmatprep.mubr.bf16.mxu0 0
  %1175 = vmatmul.mubr.bf16.gmra.mrb[0].mxu0 %v1072
  %v1176 = vpop.f32.mrb[0].mxu0
  %v1177 = vadd.f32 %v1093, %v1176
  %v1178 = vpop.f32.mrb[0].mxu0
  %v1179 = vpop.f32.mrb[0].mxu0
  %v1180 = vpop.f32.mrb[0].mxu0
  %1181 = vdwg.mxu0
  %v1182 = vmax.f32 %v1177, 0.0
  %v1183 = vpack.c.bf16 %v1182, %v1182
  %s1184 = scalar_lea.vmem %s2, 384
  %v1185 = vld [vmem:[%s1184] sm:$0xf]
  %v1186 = vld [vmem:[%s1184 + $0x4] sm:$0xf]
  %v1187 = vld [vmem:[%s1184 + $0x8] sm:$0xf]
  %v1188 = vld [vmem:[%s1184 + $0xc] sm:$0xf]
  %v1189 = vld [vmem:[%s1184 + $0x10] sm:$0xf]
  %v1190 = vld [vmem:[%s1184 + $0x14] sm:$0xf]
  %v1191 = vld [vmem:[%s1184 + $0x18] sm:$0xf]
  %v1192 = vld [vmem:[%s1184 + $0x1c] sm:$0xf]
  %v1193 = vld [vmem:[%s1184 + $0x20] sm:$0xf]
  %v1194 = vld [vmem:[%s1184 + $0x24] sm:$0xf]
  %v1195 = vld [vmem:[%s1184 + $0x28] sm:$0xf]
  %v1196 = vld [vmem:[%s1184 + $0x2c] sm:$0xf]
  %v1197 = vld [vmem:[%s1184 + $0x30] sm:$0xf]
  %v1198 = vld [vmem:[%s1184 + $0x34] sm:$0xf]
  %v1199 = vld [vmem:[%s1184 + $0x38] sm:$0xf]
  %v1200 = vld [vmem:[%s1184 + $0x3c] sm:$0xf]
  %v1201 = vlaneseq
  %v1202 = vshrl.u32 %v1201, 7
  %v1203 = vsub.s32 7, %v1202
  %v1204 = vrot.slane %v25, %v1203
  %v1221 = vunpack.c.l.b16 %v1185
  %v1222 = vunpack.c.l.b16 %v1186
  %v1223 = vunpack.c.l.b16 %v1187
  %v1224 = vunpack.c.l.b16 %v1188
  %v1225 = vunpack.c.l.b16 %v1189
  %v1226 = vunpack.c.l.b16 %v1190
  %v1227 = vunpack.c.l.b16 %v1191
  %v1228 = vunpack.c.l.b16 %v1192
  %v1229 = vunpack.c.l.b16 %v1193
  %v1230 = vunpack.c.l.b16 %v1194
  %v1231 = vunpack.c.l.b16 %v1195
  %v1232 = vunpack.c.l.b16 %v1196
  %v1233 = vunpack.c.l.b16 %v1197
  %v1234 = vunpack.c.l.b16 %v1198
  %v1235 = vunpack.c.l.b16 %v1199
  %v1236 = vunpack.c.l.b16 %v1200
  %v1237 = vpack.c.b16 %v1222, %v1221
  %v1238 = vpack.c.b16 %v1224, %v1223
  %v1239 = vpack.c.b16 %v1226, %v1225
  %v1240 = vpack.c.b16 %v1228, %v1227
  %v1241 = vpack.c.b16 %v1230, %v1229
  %v1242 = vpack.c.b16 %v1232, %v1231
  %v1243 = vpack.c.b16 %v1234, %v1233
  %v1244 = vpack.c.b16 %v1236, %v1235
  %1253 = vmatprep.subr.bf16.mxu0 0
  %1254 = vmatpush1.bf16.msra.mxu0 %v1237
  %1255 = vmatprep.subr.bf16.mxu0 0
  %1256 = vmatpush1.bf16.msra.mxu0 %v1238
  %1257 = vmatprep.subr.bf16.mxu0 0
  %1258 = vmatpush1.bf16.msra.mxu0 %v1239
  %1259 = vmatprep.subr.bf16.mxu0 0
  %1260 = vmatpush1.bf16.msra.mxu0 %v1240
  %1261 = vmatprep.subr.bf16.mxu0 0
  %1262 = vmatpush1.bf16.msra.mxu0 %v1241
  %1263 = vmatprep.subr.bf16.mxu0 0
  %1264 = vmatpush1.bf16.msra.mxu0 %v1242
  %1265 = vmatprep.subr.bf16.mxu0 0
  %1266 = vmatpush1.bf16.msra.mxu0 %v1243
  %1267 = vmatprep.subr.bf16.mxu0 0
  %1268 = vmatpush1.bf16.msra.mxu0 %v1244
  %1269 = vmatprep.subr.bf16.mxu0 0
  %1270 = vmatpush1.bf16.msra.mxu0 0
  %1271 = vmatprep.subr.bf16.mxu0 0
  %1272 = vmatpush1.bf16.msra.mxu0 0
  %1273 = vmatprep.subr.bf16.mxu0 0
  %1274 = vmatpush1.bf16.msra.mxu0 0
  %1275 = vmatprep.subr.bf16.mxu0 0
  %1276 = vmatpush1.bf16.msra.mxu0 0
  %1277 = vmatprep.subr.bf16.mxu0 0
  %1278 = vmatpush1.bf16.msra.mxu0 0
  %1279 = vmatprep.subr.bf16.mxu0 0
  %1280 = vmatpush1.bf16.msra.mxu0 0
  %1281 = vmatprep.subr.bf16.mxu0 0
  %1282 = vmatpush1.bf16.msra.mxu0 0
  %1283 = vmatprep.subr.bf16.mxu0 0
  %1284 = vmatpush1.bf16.msra.mxu0 0
  %1285 = vmatprep.mubr.bf16.mxu0 0
  %1286 = vmatmul.mubr.bf16.gmra.mrb[0].mxu0 %v1183
  %v1287 = vpop.f32.mrb[0].mxu0
  %v1288 = vadd.f32 %v1204, %v1287
  %v1289 = vpop.f32.mrb[0].mxu0
  %v1290 = vpop.f32.mrb[0].mxu0
  %v1291 = vpop.f32.mrb[0].mxu0
  %1292 = vdwg.mxu0
  %v1293 = vtanh.pop %v1288
  %1294 = vst [vmem:[%s4] sm:$0xff] %v1293
  // Predicated region
  $region18: #{predator_actor_forward.1} parent=0 // pred_check
    _
  $region19: #{predator_actor_forward.1} parent=0 // pred_check_branch
    %1296 = sbr.rel (0) target = $region21
  $region20: #{predator_actor_forward.1} parent=0 // pred_region
    _
  $region21: #{predator_actor_forward.1} parent=0 // pred_fallthru
    _
  // Predicated region
  $region22: #{predator_actor_forward.1} parent=0 // pred_check
    _
  $region23: #{predator_actor_forward.1} parent=0 // pred_check_branch
    %1298 = sbr.rel (0) target = $region25
  $region24: #{predator_actor_forward.1} parent=0 // pred_region
    _
  $region25: #{predator_actor_forward.1} parent=0 // pred_fallthru
    _

</llo_original>
